<compile_context>
chip_gen: v5e
topology: v5e:2x2
jax: 0.10.0
libtpu: 0.0.40
codegen_flags: <defaults>
</compile_context>

<pallas_src>
import functools

import jax
import jax.numpy as jnp
from jax.experimental import pallas as pl
from jax.experimental.pallas import tpu as pltpu


# ------------------------- Pallas kernels -------------------------

def _conv1_bn_relu_kernel(cols_ref, w_ref, scale_ref, shift_ref, out_ref, *, H, W):
    # cols_ref : (1, 3, (H+2)*W, Cin)  kw-shifted, row-flattened padded-input slabs
    # w_ref    : (9, Cin, Cin)         3x3 conv weights, tap index t = kh*3 + kw
    # scale/shift : (1, Cin)           folded conv-bias + BatchNorm affine (f32)
    # out_ref  : (1, H*W, Cin)
    P = H * W
    acc = jnp.dot(cols_ref[0, 0, 0:P, :], w_ref[0],
                  preferred_element_type=jnp.float32)            # tap (0,0) initializes acc
    for kh in range(3):
        for kw in range(3):
            if kh == 0 and kw == 0:
                continue
            slab = cols_ref[0, kw, kh * W: kh * W + P, :]        # contiguous, aligned window
            acc += jnp.dot(slab, w_ref[kh * 3 + kw],
                           preferred_element_type=jnp.float32)
    y = jnp.maximum(acc * scale_ref[...] + shift_ref[...], 0.0)
    out_ref[0] = y.astype(out_ref.dtype)


def _res_tail_kernel(cols_ref, w2_ref, scale2_ref, shift2_ref,
                     xs_ref, wd_ref, scaled_ref, shiftd_ref, out_ref, *, Hout, Wout):
    # Main path: strided 3x3 conv (9 accumulated MXU dots over pre-decomposed slabs) + BN + ReLU
    # Identity path: 1x1 strided conv (single matmul) + BN; fused residual add.
    # cols_ref : (1, 6, (Hout+1)*Wout, Cin)  row-parity x kw decomposition of padded mid
    # w2_ref   : (9, Cin, Cout)
    # xs_ref   : (1, Hout*Wout, Cin)         stride-2 sampled original input
    # wd_ref   : (Cin, Cout)
    # out_ref  : (1, Hout*Wout, Cout)
    P = Hout * Wout
    acc = jnp.dot(cols_ref[0, 0, 0:P, :], w2_ref[0],
                  preferred_element_type=jnp.float32)            # tap (0,0)
    for kh in range(3):
        for kw in range(3):
            if kh == 0 and kw == 0:
                continue
            s = (kh % 2) * 3 + kw
            start = (kh // 2) * Wout
            acc += jnp.dot(cols_ref[0, s, start:start + P, :], w2_ref[kh * 3 + kw],
                           preferred_element_type=jnp.float32)
    main = jnp.maximum(acc * scale2_ref[...] + shift2_ref[...], 0.0)

    ident = jnp.dot(xs_ref[0], wd_ref[...], preferred_element_type=jnp.float32)
    ident = ident * scaled_ref[...] + shiftd_ref[...]

    out_ref[0] = (main + ident).astype(out_ref.dtype)


# ------------------------- pallas_call wrappers -------------------------

_VMEM_LIMIT = 32 * 1024 * 1024


def _nbytes(*arrs):
    return int(sum(int(a.size) * a.dtype.itemsize for a in arrs))


def conv1_bn_relu(cols, w, scale, shift, *, H, W):
    N, _, Pp, Cin = cols.shape
    P = H * W
    flops = 2 * N * P * 9 * Cin * Cin
    return pl.pallas_call(
        functools.partial(_conv1_bn_relu_kernel, H=H, W=W),
        out_shape=jax.ShapeDtypeStruct((N, P, Cin), cols.dtype),
        grid=(N,),
        in_specs=[
            pl.BlockSpec((1, 3, Pp, Cin), lambda n: (n, 0, 0, 0)),
            pl.BlockSpec((9, Cin, Cin), lambda n: (0, 0, 0)),
            pl.BlockSpec((1, Cin), lambda n: (0, 0)),
            pl.BlockSpec((1, Cin), lambda n: (0, 0)),
        ],
        out_specs=pl.BlockSpec((1, P, Cin), lambda n: (n, 0, 0)),
        compiler_params=pltpu.CompilerParams(
            dimension_semantics=("parallel",),
            vmem_limit_bytes=_VMEM_LIMIT),
        cost_estimate=pl.CostEstimate(
            flops=flops, transcendentals=0,
            bytes_accessed=_nbytes(cols, w, scale, shift) + N * P * Cin * cols.dtype.itemsize),
    )(cols, w, scale, shift)


def res_tail(cols, w2, scale2, shift2, xs, wd, scaled, shiftd, *, Hout, Wout):
    N, _, Pp, Cin = cols.shape
    Cout = w2.shape[-1]
    P = Hout * Wout
    flops = 2 * N * P * (9 * Cin * Cout + Cin * Cout)
    return pl.pallas_call(
        functools.partial(_res_tail_kernel, Hout=Hout, Wout=Wout),
        out_shape=jax.ShapeDtypeStruct((N, P, Cout), jnp.float32),
        grid=(N,),
        in_specs=[
            pl.BlockSpec((1, 6, Pp, Cin), lambda n: (n, 0, 0, 0)),
            pl.BlockSpec((9, Cin, Cout), lambda n: (0, 0, 0)),
            pl.BlockSpec((1, Cout), lambda n: (0, 0)),
            pl.BlockSpec((1, Cout), lambda n: (0, 0)),
            pl.BlockSpec((1, P, Cin), lambda n: (n, 0, 0)),
            pl.BlockSpec((Cin, Cout), lambda n: (0, 0)),
            pl.BlockSpec((1, Cout), lambda n: (0, 0)),
            pl.BlockSpec((1, Cout), lambda n: (0, 0)),
        ],
        out_specs=pl.BlockSpec((1, P, Cout), lambda n: (n, 0, 0)),
        compiler_params=pltpu.CompilerParams(
            dimension_semantics=("parallel",),
            vmem_limit_bytes=_VMEM_LIMIT),
        cost_estimate=pl.CostEstimate(
            flops=flops, transcendentals=0,
            bytes_accessed=_nbytes(cols, w2, scale2, shift2, xs, wd, scaled, shiftd)
            + N * P * Cout * 4),
    )(cols, w2, scale2, shift2, xs, wd, scaled, shiftd)


# ------------------------- forward (layout glue in JAX, compute in Pallas) -------------------------

def res_block_forward(x_nchw, params, stride=2, compute_dtype=jnp.float32):
    (w1, s1, b1, w2, s2, b2, wd, sd, bd) = params
    N, Cin, H, W = x_nchw.shape
    Cout = w2.shape[-1]
    assert stride == 2, "ResBlock spec uses stride=2"
    Hout = (H + 2 - 3) // stride + 1
    Wout = (W + 2 - 3) // stride + 1
    cd = compute_dtype

    x = jnp.transpose(x_nchw, (0, 2, 3, 1))  # NHWC

    # --- conv1 (3x3, s=1, p=1) + BN + ReLU ---
    # kw-shifted, row-flattened slabs: each (kh,kw) tap is a contiguous row-range in-kernel.
    xp = jnp.pad(x, ((0, 0), (1, 1), (1, 1), (0, 0)))
    cols1 = jnp.stack([xp[:, :, kw:kw + W, :] for kw in range(3)], axis=1)
    cols1 = cols1.reshape(N, 3, (H + 2) * W, Cin).astype(cd)
    mid = conv1_bn_relu(cols1, w1.reshape(9, Cin, Cin).astype(cd),
                        s1[None], b1[None], H=H, W=W)          # (N, H*W, Cin)
    mid = mid.reshape(N, H, W, Cin)

    # --- conv2 (3x3, s=2, p=1) + BN + ReLU fused with 1x1 s=2 downsample + BN + residual add ---
    # Row-parity x kw decomposition of padded mid so that stride-2 taps are contiguous slices.
    mp = jnp.pad(mid, ((0, 0), (1, 1), (1, 1), (0, 0)))
    slabs = [mp[:, r::2, kw::2, :][:, :Hout + 1, :Wout, :]
             for r in range(2) for kw in range(3)]
    cols2 = jnp.stack(slabs, axis=1).reshape(N, 6, (Hout + 1) * Wout, Cin)

    xs = x[:, :2 * Hout:2, :2 * Wout:2, :].reshape(N, Hout * Wout, Cin).astype(cd)

    out = res_tail(cols2, w2.reshape(9, Cin, Cout).astype(cd), s2[None], b2[None],
                   xs, wd.astype(cd), sd[None], bd[None], Hout=Hout, Wout=Wout)
    out = out.reshape(N, Hout, Wout, Cout)
    return jnp.transpose(out, (0, 3, 1, 2))  # back to NCHW


# ------------------------- reference (pure JAX) -------------------------

def ref_forward(x_nchw, params, stride=2):
    (w1, s1, b1, w2, s2, b2, wd, sd, bd) = params
    Cin = w1.shape[2]
    Cout = w2.shape[3]
    x = jnp.transpose(x_nchw, (0, 2, 3, 1))
    dn = ('NHWC', 'HWIO', 'NHWC')
    z = jax.lax.conv_general_dilated(x, w1, (1, 1), [(1, 1), (1, 1)], dimension_numbers=dn)
    z = jnp.maximum(z * s1 + b1, 0.0)
    z = jax.lax.conv_general_dilated(z, w2, (stride, stride), [(1, 1), (1, 1)], dimension_numbers=dn)
    z = jnp.maximum(z * s2 + b2, 0.0)
    ident = jax.lax.conv_general_dilated(x, wd.reshape(1, 1, Cin, Cout), (stride, stride),
                                         [(0, 0), (0, 0)], dimension_numbers=dn)
    ident = ident * sd + bd
    return jnp.transpose(z + ident, (0, 3, 1, 2))


# ------------------------- parameter setup -------------------------

def fold_bn(conv_bias, gamma, beta, mean, var, eps=1e-5):
    scale = gamma / jnp.sqrt(var + eps)
    shift = (conv_bias - mean) * scale + beta
    return scale, shift


def make_params(key, Cin, Cout):
    ks = jax.random.split(key, 16)
    w1 = 0.2 * jax.random.normal(ks[0], (3, 3, Cin, Cin), jnp.float32)   # HWIO
    b1 = 0.1 * jax.random.normal(ks[1], (Cin,), jnp.float32)
    w2 = 0.2 * jax.random.normal(ks[2], (3, 3, Cin, Cout), jnp.float32)  # HWIO
    b2 = 0.1 * jax.random.normal(ks[3], (Cout,), jnp.float32)
    wd = 0.2 * jax.random.normal(ks[4], (Cin, Cout), jnp.float32)        # 1x1 conv as matmul
    bd = 0.1 * jax.random.normal(ks[5], (Cout,), jnp.float32)

    def bn(kg, kb, km, kv, C):
        gamma = 1.0 + 0.1 * jax.random.normal(kg, (C,), jnp.float32)
        beta = 0.1 * jax.random.normal(kb, (C,), jnp.float32)
        mean = 0.1 * jax.random.normal(km, (C,), jnp.float32)
        var = 1.0 + 0.1 * jnp.abs(jax.random.normal(kv, (C,), jnp.float32))
        return gamma, beta, mean, var

    g1, be1, m1, v1 = bn(ks[6], ks[7], ks[8], ks[9], Cin)
    g2, be2, m2, v2 = bn(ks[10], ks[11], ks[12], ks[13], Cout)
    gd, bed, md, vd = bn(ks[14], ks[15], ks[6], ks[7], Cout)

    s1, sh1 = fold_bn(b1, g1, be1, m1, v1)
    s2, sh2 = fold_bn(b2, g2, be2, m2, v2)
    sd, shd = fold_bn(bd, gd, bed, md, vd)
    return (w1, s1, sh1, w2, s2, sh2, wd, sd, shd)


if __name__ == "__main__":
    N, Cin, H, W = 2, 4, 16, 16
    Cout, stride = 8, 2

    key = jax.random.PRNGKey(0)
    kx, kp = jax.random.split(key)
    x = jax.random.normal(kx, (N, Cin, H, W), jnp.float32)   # PyTorch NCHW input
    params = make_params(kp, Cin, Cout)

    ref = jax.block_until_ready(ref_forward(x, params, stride=stride))

    # f32 path (tight check against the lax.conv reference)
    out = jax.block_until_ready(
        res_block_forward(x, params, stride=stride, compute_dtype=jnp.float32))
    assert out.shape == (N, Cout, H // stride, W // stride), out.shape
    assert jnp.allclose(out, ref, atol=1e-4, rtol=1e-4), float(jnp.max(jnp.abs(out - ref)))

    # bf16 MXU operand path (f32 accumulation) -- looser tolerance vs. the f32 reference
    out_bf16 = jax.block_until_ready(
        res_block_forward(x, params, stride=stride, compute_dtype=jnp.bfloat16))
    assert jnp.allclose(out_bf16, ref, atol=1e-1, rtol=5e-2), \
        float(jnp.max(jnp.abs(out_bf16 - ref)))

    print("KERNEL_OK")
</pallas_src>

<mosaic_0001>
module attributes {stable_mosaic.version = 11 : i64} {
  func.func @_conv1_bn_relu_kernel(%arg0: i32, %arg1: memref<1x3x288x4xf32, #tpu.memory_space<vmem>>, %arg2: memref<9x4x4xf32, #tpu.memory_space<vmem>>, %arg3: memref<1x4xf32, #tpu.memory_space<vmem>>, %arg4: memref<1x4xf32, #tpu.memory_space<vmem>>, %arg5: memref<1x256x4xf32, #tpu.memory_space<vmem>>) attributes {dimension_semantics = [#tpu.dimension_semantics<parallel>], iteration_bounds = array<i64: 2>, scalar_prefetch = 0 : i64, scratch_operands = 0 : i64, tpu.core_type = #tpu.core_type<tc>, window_params = [{transform_indices = @transform_0, window_bounds = array<i64: 1, 3, 288, 4>}, {pipeline_mode = #tpu.pipeline_mode<synchronous>, transform_indices = @transform_1, window_bounds = array<i64: 9, 4, 4>}, {pipeline_mode = #tpu.pipeline_mode<synchronous>, transform_indices = @transform_2, window_bounds = array<i64: 1, 4>}, {pipeline_mode = #tpu.pipeline_mode<synchronous>, transform_indices = @transform_3, window_bounds = array<i64: 1, 4>}, {transform_indices = @transform_4, window_bounds = array<i64: 1, 256, 4>}]} {
    %c0 = arith.constant 0 : index
    %c0_0 = arith.constant 0 : index
    %c0_1 = arith.constant 0 : index
    %c0_2 = arith.constant 0 : index
    %0 = vector.load %arg1[%c0, %c0_0, %c0_1, %c0_2] : memref<1x3x288x4xf32, #tpu.memory_space<vmem>>, vector<1x1x256x4xf32>
    %1 = vector.shape_cast %0 : vector<1x1x256x4xf32> to vector<256x4xf32>
    %c0_3 = arith.constant 0 : index
    %c0_4 = arith.constant 0 : index
    %c0_5 = arith.constant 0 : index
    %2 = vector.load %arg2[%c0_3, %c0_4, %c0_5] : memref<9x4x4xf32, #tpu.memory_space<vmem>>, vector<1x4x4xf32>
    %3 = vector.shape_cast %2 : vector<1x4x4xf32> to vector<4x4xf32>
    %cst = arith.constant dense<0.000000e+00> : vector<256x4xf32>
    %4 = tpu.matmul %1, %3, %cst {dimension_numbers = #tpu.dot_dimension_numbers<[1], [0], [0], [1], [0, 0, 1, 1], [], []>} : vector<256x4xf32>, vector<4x4xf32>, vector<256x4xf32> -> vector<256x4xf32>
    %c0_6 = arith.constant 0 : index
    %c1 = arith.constant 1 : index
    %c0_7 = arith.constant 0 : index
    %c0_8 = arith.constant 0 : index
    %5 = vector.load %arg1[%c0_6, %c1, %c0_7, %c0_8] : memref<1x3x288x4xf32, #tpu.memory_space<vmem>>, vector<1x1x256x4xf32>
    %6 = vector.shape_cast %5 : vector<1x1x256x4xf32> to vector<256x4xf32>
    %c1_9 = arith.constant 1 : index
    %c0_10 = arith.constant 0 : index
    %c0_11 = arith.constant 0 : index
    %7 = vector.load %arg2[%c1_9, %c0_10, %c0_11] : memref<9x4x4xf32, #tpu.memory_space<vmem>>, vector<1x4x4xf32>
    %8 = vector.shape_cast %7 : vector<1x4x4xf32> to vector<4x4xf32>
    %cst_12 = arith.constant dense<0.000000e+00> : vector<256x4xf32>
    %9 = tpu.matmul %6, %8, %cst_12 {dimension_numbers = #tpu.dot_dimension_numbers<[1], [0], [0], [1], [0, 0, 1, 1], [], []>} : vector<256x4xf32>, vector<4x4xf32>, vector<256x4xf32> -> vector<256x4xf32>
    %10 = arith.addf %4, %9 : vector<256x4xf32>
    %c0_13 = arith.constant 0 : index
    %c2 = arith.constant 2 : index
    %c0_14 = arith.constant 0 : index
    %c0_15 = arith.constant 0 : index
    %11 = vector.load %arg1[%c0_13, %c2, %c0_14, %c0_15] : memref<1x3x288x4xf32, #tpu.memory_space<vmem>>, vector<1x1x256x4xf32>
    %12 = vector.shape_cast %11 : vector<1x1x256x4xf32> to vector<256x4xf32>
    %c2_16 = arith.constant 2 : index
    %c0_17 = arith.constant 0 : index
    %c0_18 = arith.constant 0 : index
    %13 = vector.load %arg2[%c2_16, %c0_17, %c0_18] : memref<9x4x4xf32, #tpu.memory_space<vmem>>, vector<1x4x4xf32>
    %14 = vector.shape_cast %13 : vector<1x4x4xf32> to vector<4x4xf32>
    %cst_19 = arith.constant dense<0.000000e+00> : vector<256x4xf32>
    %15 = tpu.matmul %12, %14, %cst_19 {dimension_numbers = #tpu.dot_dimension_numbers<[1], [0], [0], [1], [0, 0, 1, 1], [], []>} : vector<256x4xf32>, vector<4x4xf32>, vector<256x4xf32> -> vector<256x4xf32>
    %16 = arith.addf %10, %15 : vector<256x4xf32>
    %c0_20 = arith.constant 0 : index
    %c0_21 = arith.constant 0 : index
    %c16 = arith.constant 16 : index
    %c0_22 = arith.constant 0 : index
    %17 = vector.load %arg1[%c0_20, %c0_21, %c16, %c0_22] : memref<1x3x288x4xf32, #tpu.memory_space<vmem>>, vector<1x1x256x4xf32>
    %18 = vector.shape_cast %17 : vector<1x1x256x4xf32> to vector<256x4xf32>
    %c3 = arith.constant 3 : index
    %c0_23 = arith.constant 0 : index
    %c0_24 = arith.constant 0 : index
    %19 = vector.load %arg2[%c3, %c0_23, %c0_24] : memref<9x4x4xf32, #tpu.memory_space<vmem>>, vector<1x4x4xf32>
    %20 = vector.shape_cast %19 : vector<1x4x4xf32> to vector<4x4xf32>
    %cst_25 = arith.constant dense<0.000000e+00> : vector<256x4xf32>
    %21 = tpu.matmul %18, %20, %cst_25 {dimension_numbers = #tpu.dot_dimension_numbers<[1], [0], [0], [1], [0, 0, 1, 1], [], []>} : vector<256x4xf32>, vector<4x4xf32>, vector<256x4xf32> -> vector<256x4xf32>
    %22 = arith.addf %16, %21 : vector<256x4xf32>
    %c0_26 = arith.constant 0 : index
    %c1_27 = arith.constant 1 : index
    %c16_28 = arith.constant 16 : index
    %c0_29 = arith.constant 0 : index
    %23 = vector.load %arg1[%c0_26, %c1_27, %c16_28, %c0_29] : memref<1x3x288x4xf32, #tpu.memory_space<vmem>>, vector<1x1x256x4xf32>
    %24 = vector.shape_cast %23 : vector<1x1x256x4xf32> to vector<256x4xf32>
    %c4 = arith.constant 4 : index
    %c0_30 = arith.constant 0 : index
    %c0_31 = arith.constant 0 : index
    %25 = vector.load %arg2[%c4, %c0_30, %c0_31] : memref<9x4x4xf32, #tpu.memory_space<vmem>>, vector<1x4x4xf32>
    %26 = vector.shape_cast %25 : vector<1x4x4xf32> to vector<4x4xf32>
    %cst_32 = arith.constant dense<0.000000e+00> : vector<256x4xf32>
    %27 = tpu.matmul %24, %26, %cst_32 {dimension_numbers = #tpu.dot_dimension_numbers<[1], [0], [0], [1], [0, 0, 1, 1], [], []>} : vector<256x4xf32>, vector<4x4xf32>, vector<256x4xf32> -> vector<256x4xf32>
    %28 = arith.addf %22, %27 : vector<256x4xf32>
    %c0_33 = arith.constant 0 : index
    %c2_34 = arith.constant 2 : index
    %c16_35 = arith.constant 16 : index
    %c0_36 = arith.constant 0 : index
    %29 = vector.load %arg1[%c0_33, %c2_34, %c16_35, %c0_36] : memref<1x3x288x4xf32, #tpu.memory_space<vmem>>, vector<1x1x256x4xf32>
    %30 = vector.shape_cast %29 : vector<1x1x256x4xf32> to vector<256x4xf32>
    %c5 = arith.constant 5 : index
    %c0_37 = arith.constant 0 : index
    %c0_38 = arith.constant 0 : index
    %31 = vector.load %arg2[%c5, %c0_37, %c0_38] : memref<9x4x4xf32, #tpu.memory_space<vmem>>, vector<1x4x4xf32>
    %32 = vector.shape_cast %31 : vector<1x4x4xf32> to vector<4x4xf32>
    %cst_39 = arith.constant dense<0.000000e+00> : vector<256x4xf32>
    %33 = tpu.matmul %30, %32, %cst_39 {dimension_numbers = #tpu.dot_dimension_numbers<[1], [0], [0], [1], [0, 0, 1, 1], [], []>} : vector<256x4xf32>, vector<4x4xf32>, vector<256x4xf32> -> vector<256x4xf32>
    %34 = arith.addf %28, %33 : vector<256x4xf32>
    %c0_40 = arith.constant 0 : index
    %c0_41 = arith.constant 0 : index
    %c32 = arith.constant 32 : index
    %c0_42 = arith.constant 0 : index
    %35 = vector.load %arg1[%c0_40, %c0_41, %c32, %c0_42] : memref<1x3x288x4xf32, #tpu.memory_space<vmem>>, vector<1x1x256x4xf32>
    %36 = vector.shape_cast %35 : vector<1x1x256x4xf32> to vector<256x4xf32>
    %c6 = arith.constant 6 : index
    %c0_43 = arith.constant 0 : index
    %c0_44 = arith.constant 0 : index
    %37 = vector.load %arg2[%c6, %c0_43, %c0_44] : memref<9x4x4xf32, #tpu.memory_space<vmem>>, vector<1x4x4xf32>
    %38 = vector.shape_cast %37 : vector<1x4x4xf32> to vector<4x4xf32>
    %cst_45 = arith.constant dense<0.000000e+00> : vector<256x4xf32>
    %39 = tpu.matmul %36, %38, %cst_45 {dimension_numbers = #tpu.dot_dimension_numbers<[1], [0], [0], [1], [0, 0, 1, 1], [], []>} : vector<256x4xf32>, vector<4x4xf32>, vector<256x4xf32> -> vector<256x4xf32>
    %40 = arith.addf %34, %39 : vector<256x4xf32>
    %c0_46 = arith.constant 0 : index
    %c1_47 = arith.constant 1 : index
    %c32_48 = arith.constant 32 : index
    %c0_49 = arith.constant 0 : index
    %41 = vector.load %arg1[%c0_46, %c1_47, %c32_48, %c0_49] : memref<1x3x288x4xf32, #tpu.memory_space<vmem>>, vector<1x1x256x4xf32>
    %42 = vector.shape_cast %41 : vector<1x1x256x4xf32> to vector<256x4xf32>
    %c7 = arith.constant 7 : index
    %c0_50 = arith.constant 0 : index
    %c0_51 = arith.constant 0 : index
    %43 = vector.load %arg2[%c7, %c0_50, %c0_51] : memref<9x4x4xf32, #tpu.memory_space<vmem>>, vector<1x4x4xf32>
    %44 = vector.shape_cast %43 : vector<1x4x4xf32> to vector<4x4xf32>
    %cst_52 = arith.constant dense<0.000000e+00> : vector<256x4xf32>
    %45 = tpu.matmul %42, %44, %cst_52 {dimension_numbers = #tpu.dot_dimension_numbers<[1], [0], [0], [1], [0, 0, 1, 1], [], []>} : vector<256x4xf32>, vector<4x4xf32>, vector<256x4xf32> -> vector<256x4xf32>
    %46 = arith.addf %40, %45 : vector<256x4xf32>
    %c0_53 = arith.constant 0 : index
    %c2_54 = arith.constant 2 : index
    %c32_55 = arith.constant 32 : index
    %c0_56 = arith.constant 0 : index
    %47 = vector.load %arg1[%c0_53, %c2_54, %c32_55, %c0_56] : memref<1x3x288x4xf32, #tpu.memory_space<vmem>>, vector<1x1x256x4xf32>
    %48 = vector.shape_cast %47 : vector<1x1x256x4xf32> to vector<256x4xf32>
    %c8 = arith.constant 8 : index
    %c0_57 = arith.constant 0 : index
    %c0_58 = arith.constant 0 : index
    %49 = vector.load %arg2[%c8, %c0_57, %c0_58] : memref<9x4x4xf32, #tpu.memory_space<vmem>>, vector<1x4x4xf32>
    %50 = vector.shape_cast %49 : vector<1x4x4xf32> to vector<4x4xf32>
    %cst_59 = arith.constant dense<0.000000e+00> : vector<256x4xf32>
    %51 = tpu.matmul %48, %50, %cst_59 {dimension_numbers = #tpu.dot_dimension_numbers<[1], [0], [0], [1], [0, 0, 1, 1], [], []>} : vector<256x4xf32>, vector<4x4xf32>, vector<256x4xf32> -> vector<256x4xf32>
    %52 = arith.addf %46, %51 : vector<256x4xf32>
    %c0_60 = arith.constant 0 : index
    %c0_61 = arith.constant 0 : index
    %53 = vector.load %arg3[%c0_60, %c0_61] : memref<1x4xf32, #tpu.memory_space<vmem>>, vector<1x4xf32>
    %54 = vector.broadcast %53 : vector<1x4xf32> to vector<256x4xf32>
    %55 = arith.mulf %52, %54 : vector<256x4xf32>
    %c0_62 = arith.constant 0 : index
    %c0_63 = arith.constant 0 : index
    %56 = vector.load %arg4[%c0_62, %c0_63] : memref<1x4xf32, #tpu.memory_space<vmem>>, vector<1x4xf32>
    %57 = vector.broadcast %56 : vector<1x4xf32> to vector<256x4xf32>
    %58 = arith.addf %55, %57 : vector<256x4xf32>
    %cst_64 = arith.constant 0.000000e+00 : f32
    %59 = vector.broadcast %cst_64 : f32 to vector<256x4xf32>
    %60 = arith.maximumf %58, %59 : vector<256x4xf32>
    %c0_65 = arith.constant 0 : index
    %c0_66 = arith.constant 0 : index
    %c0_67 = arith.constant 0 : index
    %61 = vector.load %arg5[%c0_65, %c0_66, %c0_67] : memref<1x256x4xf32, #tpu.memory_space<vmem>>, vector<1x256x4xf32>
    %62 = vector.shape_cast %61 : vector<1x256x4xf32> to vector<256x4xf32>
    %63 = vector.shape_cast %60 : vector<256x4xf32> to vector<1x256x4xf32>
    tpu.vector_store %arg5[%c0_65, %c0_66, %c0_67], %63 {strides = array<i32>} : memref<1x256x4xf32, #tpu.memory_space<vmem>>, vector<1x256x4xf32>,
    return
  }
  func.func @transform_0(%arg0: i32) -> (i32, i32, i32, i32) {
    %c0_i32 = arith.constant 0 : i32
    %c0_i32_0 = arith.constant 0 : i32
    %c0_i32_1 = arith.constant 0 : i32
    %c0_i32_2 = arith.constant 0 : i32
    return %arg0, %c0_i32, %c0_i32_0, %c0_i32_1 : i32, i32, i32, i32
  }
  func.func @transform_1(%arg0: i32) -> (i32, i32, i32) {
    %c0_i32 = arith.constant 0 : i32
    %c0_i32_0 = arith.constant 0 : i32
    %c0_i32_1 = arith.constant 0 : i32
    %c0_i32_2 = arith.constant 0 : i32
    return %c0_i32, %c0_i32_0, %c0_i32_1 : i32, i32, i32
  }
  func.func @transform_2(%arg0: i32) -> (i32, i32) {
    %c0_i32 = arith.constant 0 : i32
    %c0_i32_0 = arith.constant 0 : i32
    %c0_i32_1 = arith.constant 0 : i32
    return %c0_i32, %c0_i32_0 : i32, i32
  }
  func.func @transform_3(%arg0: i32) -> (i32, i32) {
    %c0_i32 = arith.constant 0 : i32
    %c0_i32_0 = arith.constant 0 : i32
    %c0_i32_1 = arith.constant 0 : i32
    return %c0_i32, %c0_i32_0 : i32, i32
  }
  func.func @transform_4(%arg0: i32) -> (i32, i32, i32) {
    %c0_i32 = arith.constant 0 : i32
    %c0_i32_0 = arith.constant 0 : i32
    %c0_i32_1 = arith.constant 0 : i32
    return %arg0, %c0_i32, %c0_i32_0 : i32, i32, i32
  }
}

</mosaic_0001>

<llo_original>
// kernel: tpu_custom_call.1
$region0: #{tpu_custom_call.1}
  #allocation0 [shape = 'u32[]', space=smem, size = 0x4, offset = 0x4, fixed_abs, tag = 'smem constant byte address 0x4 - core index']
  #allocation1 [shape = 'u32[72,128]{1,0:T(1,128)}', space=vmem, size = 0x9000, scoped, tag = 'internal scratch']
  %s0 = inlined_call_operand.vmem [shape: f32[2,3,288,4], index: 0, kind: input, shape index: {}]
  %s1 = inlined_call_operand.vmem [shape: f32[9,4,4], index: 1, kind: input, shape index: {}]
  %s2 = inlined_call_operand.vmem [shape: f32[1,4], index: 2, kind: input, shape index: {}]
  %s3 = inlined_call_operand.vmem [shape: f32[1,4], index: 3, kind: input, shape index: {}]
  %s4 = inlined_call_operand.vmem [shape: f32[2,256,4], index: 4, kind: output, shape index: {}]
  %s5 = sld [smem:[#allocation0]]
  $region49: #{tpu_custom_call.1} parent=0
    _
  %s7 = ssub.s32 1, %s5
  %s8 = scalar_select 0, %s7, %s5
  loop: start=0, step=1, limit=4
  $region2: #{tpu_custom_call.1} parent=0 // loop_pre_header
    _
  $region3: #{tpu_custom_call.1} parent=0 // loop_header
    %s10 = sphi 0, %s14
    %p11 = scmp.ge.s32.totalorder %s10, 4
    %s20 = sphi 0, %s22
    %s23 = sphi 0, %s20
    %s24 = sphi 0, %s23
    %s40 = sphi 0, %s24
    %s44 = sphi 0, %s44
    %s46 = sphi 0, %s44
    %s47 = sphi 0, %s46
    %s61 = sphi 0, %s47
    %s65 = sphi 0, %s65
    %s67 = sphi 0, %s65
    %s68 = sphi 0, %s67
    %s82 = sphi 0, %s68
    %s86 = sphi 0, %s86
    %s88 = sphi 0, %s86
    %s89 = sphi 0, %s88
    %s103 = sphi 0, %s89
    %s109 = sphi 0, %s111
    %s112 = sphi 0, %s109
    %s113 = sphi 0, %s112
    %s129 = sphi 0, %s113
  $region4: #{tpu_custom_call.1} parent=0 // loop_header_branch
    %13 = sbr.rel (%p11) target = $region8
  $region5: #{tpu_custom_call.1} parent=0 // loop_body
    %s15 = ssub.s32 %s10, 1
    %s16 = ssub.s32 %s10, 2
    %s17 = sadd.s32 %s10, 1
    %s18 = ssub.s32 %s10, %s17
    %p19 = scmp.eq.s32.totalorder %s18, 0
    %s21 = sadd.s32 %s20, 1
    %s22 = scalar_select %p19, %s20, %s21
    %p25 = pneg %p19
    %p26 = scmp.eq.s32.totalorder %s10, 1
    %p27 = por %p25, %p26
    %p28 = scmp.ne.s32.totalorder %s20, %s23
    %p29 = scmp.eq.s32.totalorder %s10, 0
    %p30 = por %p28, %p29
    %p31 = scmp.ne.s32.totalorder %s20, %s23
    %p32 = scmp.eq.s32.totalorder %s15, 1
    %p33 = por %p31, %p32
    %p34 = scmp.ne.s32.totalorder %s23, %s24
    %p35 = scmp.eq.s32.totalorder %s15, 0
    %p36 = por %p34, %p35
    %p37 = scmp.ne.s32.totalorder %s23, %s24
    %p38 = scmp.eq.s32.totalorder %s16, 1
    %p39 = por %p37, %p38
    %p41 = scmp.ne.s32.totalorder %s24, %s40
    %p42 = scmp.eq.s32.totalorder %s16, 0
    %p43 = por %p41, %p42
    %s45 = sadd.s32 %s44, 1
    %p48 = scmp.eq.s32.totalorder %s10, 1
    %p49 = scmp.ne.s32.totalorder %s44, %s46
    %p50 = scmp.eq.s32.totalorder %s10, 0
    %p51 = por %p49, %p50
    %p52 = scmp.ne.s32.totalorder %s44, %s46
    %p53 = scmp.eq.s32.totalorder %s15, 1
    %p54 = por %p52, %p53
    %p55 = scmp.ne.s32.totalorder %s46, %s47
    %p56 = scmp.eq.s32.totalorder %s15, 0
    %p57 = por %p55, %p56
    %p58 = scmp.ne.s32.totalorder %s46, %s47
    %p59 = scmp.eq.s32.totalorder %s16, 1
    %p60 = por %p58, %p59
    %p62 = scmp.ne.s32.totalorder %s47, %s61
    %p63 = scmp.eq.s32.totalorder %s16, 0
    %p64 = por %p62, %p63
    %s66 = sadd.s32 %s65, 1
    %p69 = scmp.eq.s32.totalorder %s10, 1
    %p70 = scmp.ne.s32.totalorder %s65, %s67
    %p71 = scmp.eq.s32.totalorder %s10, 0
    %p72 = por %p70, %p71
    %p73 = scmp.ne.s32.totalorder %s65, %s67
    %p74 = scmp.eq.s32.totalorder %s15, 1
    %p75 = por %p73, %p74
    %p76 = scmp.ne.s32.totalorder %s67, %s68
    %p77 = scmp.eq.s32.totalorder %s15, 0
    %p78 = por %p76, %p77
    %p79 = scmp.ne.s32.totalorder %s67, %s68
    %p80 = scmp.eq.s32.totalorder %s16, 1
    %p81 = por %p79, %p80
    %p83 = scmp.ne.s32.totalorder %s68, %s82
    %p84 = scmp.eq.s32.totalorder %s16, 0
    %p85 = por %p83, %p84
    %s87 = sadd.s32 %s86, 1
    %p90 = scmp.eq.s32.totalorder %s10, 1
    %p91 = scmp.ne.s32.totalorder %s86, %s88
    %p92 = scmp.eq.s32.totalorder %s10, 0
    %p93 = por %p91, %p92
    %p94 = scmp.ne.s32.totalorder %s86, %s88
    %p95 = scmp.eq.s32.totalorder %s15, 1
    %p96 = por %p94, %p95
    %p97 = scmp.ne.s32.totalorder %s88, %s89
    %p98 = scmp.eq.s32.totalorder %s15, 0
    %p99 = por %p97, %p98
    %p100 = scmp.ne.s32.totalorder %s88, %s89
    %p101 = scmp.eq.s32.totalorder %s16, 1
    %p102 = por %p100, %p101
    %p104 = scmp.ne.s32.totalorder %s89, %s103
    %p105 = scmp.eq.s32.totalorder %s16, 0
    %p106 = por %p104, %p105
    %s107 = ssub.s32 %s10, %s17
    %p108 = scmp.eq.s32.totalorder %s107, 0
    %s110 = sadd.s32 %s109, 1
    %s111 = scalar_select %p108, %s109, %s110
    %p114 = pneg %p108
    %p115 = scmp.eq.s32.totalorder %s10, 1
    %p116 = por %p114, %p115
    %p117 = scmp.ne.s32.totalorder %s109, %s112
    %p118 = scmp.eq.s32.totalorder %s10, 0
    %p119 = por %p117, %p118
    %p120 = scmp.ne.s32.totalorder %s109, %s112
    %p121 = scmp.eq.s32.totalorder %s15, 1
    %p122 = por %p120, %p121
    %p123 = scmp.ne.s32.totalorder %s112, %s113
    %p124 = scmp.eq.s32.totalorder %s15, 0
    %p125 = por %p123, %p124
    %p126 = scmp.ne.s32.totalorder %s112, %s113
    %p127 = scmp.eq.s32.totalorder %s16, 1
    %p128 = por %p126, %p127
    %p130 = scmp.ne.s32.totalorder %s113, %s129
    %p131 = scmp.eq.s32.totalorder %s16, 0
    %p132 = por %p130, %p131
    %p133 = scmp.le.s32.totalorder 1, %s10
    %p134 = scmp.lt.s32.totalorder %s10, 3
    %p135 = pnand %p133, %p134
    %p136 = pneg %p135
    // Predicated region
    $region9: #{tpu_custom_call.1} parent=5 // pred_check
      _
    $region10: #{tpu_custom_call.1} parent=5 // pred_check_branch
      %138 = sbr.rel (%p135) target = $region12
    $region11: #{tpu_custom_call.1} parent=5 // pred_region
      %s139 = ssub.s32 %s10, 1
      // Predicated region
      $region13: #{tpu_custom_call.1} parent=11 // pred_check
        %p140 = pneg %p57
      $region14: #{tpu_custom_call.1} parent=11 // pred_check_branch
        %142 = sbr.rel (%p140) target = $region16
      $region15: #{tpu_custom_call.1} parent=11 // pred_region
        _
      $region16: #{tpu_custom_call.1} parent=11 // pred_fallthru
        _
      // Predicated region
      $region17: #{tpu_custom_call.1} parent=11 // pred_check
        %p143 = pneg %p78
      $region18: #{tpu_custom_call.1} parent=11 // pred_check_branch
        %145 = sbr.rel (%p143) target = $region20
      $region19: #{tpu_custom_call.1} parent=11 // pred_region
        _
      $region20: #{tpu_custom_call.1} parent=11 // pred_fallthru
        _
      // Predicated region
      $region21: #{tpu_custom_call.1} parent=11 // pred_check
        %p146 = pneg %p99
      $region22: #{tpu_custom_call.1} parent=11 // pred_check_branch
        %148 = sbr.rel (%p146) target = $region24
      $region23: #{tpu_custom_call.1} parent=11 // pred_region
        _
      $region24: #{tpu_custom_call.1} parent=11 // pred_fallthru
        _
    $region12: #{tpu_custom_call.1} parent=5 // pred_fallthru
      _
    %p149 = scmp.lt.s32.totalorder %s10, 2
    // Predicated region
    $region25: #{tpu_custom_call.1} parent=5 // pred_check
      %p150 = pneg %p149
    $region26: #{tpu_custom_call.1} parent=5 // pred_check_branch
      %152 = sbr.rel (%p150) target = $region28
    $region27: #{tpu_custom_call.1} parent=5 // pred_region
      // Predicated region
      $region29: #{tpu_custom_call.1} parent=27 // pred_check
        %p153 = pneg %p30
      $region30: #{tpu_custom_call.1} parent=27 // pred_check_branch
        %155 = sbr.rel (%p153) target = $region32
      $region31: #{tpu_custom_call.1} parent=27 // pred_region
        %p156 = scmp.lt.s32.totalorder %s10, 1
        %s157 = scalar_select %p156, %s10, 1
        %s158 = smul.addr %s157, 108
        %s159 = smul.addr %s158, 8
        %s160 = scalar_lea.vmem %s0, %s159
      $region32: #{tpu_custom_call.1} parent=27 // pred_fallthru
        _
    $region28: #{tpu_custom_call.1} parent=5 // pred_fallthru
      _
    %p161 = scmp.le.s32.totalorder 1, %s10
    %p162 = scmp.lt.s32.totalorder %s10, 3
    %p163 = pnand %p161, %p162
    %p164 = pneg %p163
    // Predicated region
    $region33: #{tpu_custom_call.1} parent=5 // pred_check
      _
    $region34: #{tpu_custom_call.1} parent=5 // pred_check_branch
      %166 = sbr.rel (%p163) target = $region36
    $region35: #{tpu_custom_call.1} parent=5 // pred_region
      %s167 = ssub.s32 %s10, 1
      %p168 = scmp.lt.s32.totalorder %s15, 1
      %s169 = scalar_select %p168, %s15, 1
      %s170 = smul.addr %s169, 108
      %s171 = smul.addr %s170, 8
      %s172 = scalar_lea.vmem %s0, %s171
      %p173 = pneg %p36
      %p174 = pneg %p33
      %p175 = pneg %p57
      %p176 = pneg %p54
      %p177 = pneg %p78
      %p178 = pneg %p75
      %p179 = pneg %p99
      %p180 = pneg %p96
      %p181 = pneg %p125
      %p182 = pneg %p122
      %p183 = scmp.lt.s32.totalorder %s15, 1
      %s184 = scalar_select %p183, %s15, 1
      %s185 = smul.addr %s184, 32
      %s186 = smul.addr %s185, 8
      %s187 = scalar_lea.vmem %s4, %s186
      %p188 = scmp.lt.s32.totalorder %s15, 1
      %s189 = scalar_select %p188, %s15, 1
      %s190 = smul.addr %s189, 108
      %s191 = smul.addr %s190, 8
      %s192 = scalar_lea.vmem %s0, %s191
      %p193 = scmp.lt.s32.totalorder %s15, 1
      %s194 = scalar_select %p193, %s15, 1
      %s195 = smul.addr %s194, 32
      %s196 = smul.addr %s195, 8
      %s197 = scalar_lea.vmem %s4, %s196
      %v198 = vld [vmem:[%s192] sm:$0xff]
      %v199 = vld [vmem:[%s192 + $0x8] sm:$0xff]
      %v200 = vld [vmem:[%s192 + $0x10] sm:$0xff]
      %v201 = vld [vmem:[%s192 + $0x18] sm:$0xff]
      %v202 = vld [vmem:[%s192 + $0x20] sm:$0xff]
      %v203 = vld [vmem:[%s192 + $0x28] sm:$0xff]
      %v204 = vld [vmem:[%s192 + $0x30] sm:$0xff]
      %v205 = vld [vmem:[%s192 + $0x38] sm:$0xff]
      %v206 = vld [vmem:[%s192 + $0x40] sm:$0xff]
      %v207 = vld [vmem:[%s192 + $0x48] sm:$0xff]
      %v208 = vld [vmem:[%s192 + $0x50] sm:$0xff]
      %v209 = vld [vmem:[%s192 + $0x58] sm:$0xff]
      %v210 = vld [vmem:[%s192 + $0x60] sm:$0xff]
      %v211 = vld [vmem:[%s192 + $0x68] sm:$0xff]
      %v212 = vld [vmem:[%s192 + $0x70] sm:$0xff]
      %v213 = vld [vmem:[%s192 + $0x78] sm:$0xff]
      %v214 = vld [vmem:[%s192 + $0x80] sm:$0xff]
      %v215 = vld [vmem:[%s192 + $0x88] sm:$0xff]
      %v216 = vld [vmem:[%s192 + $0x90] sm:$0xff]
      %v217 = vld [vmem:[%s192 + $0x98] sm:$0xff]
      %v218 = vld [vmem:[%s192 + $0xa0] sm:$0xff]
      %v219 = vld [vmem:[%s192 + $0xa8] sm:$0xff]
      %v220 = vld [vmem:[%s192 + $0xb0] sm:$0xff]
      %v221 = vld [vmem:[%s192 + $0xb8] sm:$0xff]
      %v222 = vld [vmem:[%s192 + $0xc0] sm:$0xff]
      %v223 = vld [vmem:[%s192 + $0xc8] sm:$0xff]
      %v224 = vld [vmem:[%s192 + $0xd0] sm:$0xff]
      %v225 = vld [vmem:[%s192 + $0xd8] sm:$0xff]
      %v226 = vld [vmem:[%s192 + $0xe0] sm:$0xff]
      %v227 = vld [vmem:[%s192 + $0xe8] sm:$0xff]
      %v228 = vld [vmem:[%s192 + $0xf0] sm:$0xff]
      %v229 = vld [vmem:[%s192 + $0xf8] sm:$0xff]
      %v230 = vld [vmem:[%s1] sm:$0xf]
      %s231 = scalar_lea.vmem %s192, 288
      %v232 = vld [vmem:[%s231] sm:$0xff]
      %v233 = vld [vmem:[%s231 + $0x8] sm:$0xff]
      %v234 = vld [vmem:[%s231 + $0x10] sm:$0xff]
      %v235 = vld [vmem:[%s231 + $0x18] sm:$0xff]
      %v236 = vld [vmem:[%s231 + $0x20] sm:$0xff]
      %v237 = vld [vmem:[%s231 + $0x28] sm:$0xff]
      %v238 = vld [vmem:[%s231 + $0x30] sm:$0xff]
      %v239 = vld [vmem:[%s231 + $0x38] sm:$0xff]
      %v240 = vld [vmem:[%s231 + $0x40] sm:$0xff]
      %v241 = vld [vmem:[%s231 + $0x48] sm:$0xff]
      %v242 = vld [vmem:[%s231 + $0x50] sm:$0xff]
      %v243 = vld [vmem:[%s231 + $0x58] sm:$0xff]
      %v244 = vld [vmem:[%s231 + $0x60] sm:$0xff]
      %v245 = vld [vmem:[%s231 + $0x68] sm:$0xff]
      %v246 = vld [vmem:[%s231 + $0x70] sm:$0xff]
      %v247 = vld [vmem:[%s231 + $0x78] sm:$0xff]
      %v248 = vld [vmem:[%s231 + $0x80] sm:$0xff]
      %v249 = vld [vmem:[%s231 + $0x88] sm:$0xff]
      %v250 = vld [vmem:[%s231 + $0x90] sm:$0xff]
      %v251 = vld [vmem:[%s231 + $0x98] sm:$0xff]
      %v252 = vld [vmem:[%s231 + $0xa0] sm:$0xff]
      %v253 = vld [vmem:[%s231 + $0xa8] sm:$0xff]
      %v254 = vld [vmem:[%s231 + $0xb0] sm:$0xff]
      %v255 = vld [vmem:[%s231 + $0xb8] sm:$0xff]
      %v256 = vld [vmem:[%s231 + $0xc0] sm:$0xff]
      %v257 = vld [vmem:[%s231 + $0xc8] sm:$0xff]
      %v258 = vld [vmem:[%s231 + $0xd0] sm:$0xff]
      %v259 = vld [vmem:[%s231 + $0xd8] sm:$0xff]
      %v260 = vld [vmem:[%s231 + $0xe0] sm:$0xff]
      %v261 = vld [vmem:[%s231 + $0xe8] sm:$0xff]
      %v262 = vld [vmem:[%s231 + $0xf0] sm:$0xff]
      %v263 = vld [vmem:[%s231 + $0xf8] sm:$0xff]
      %s264 = scalar_lea.vmem %s1, 4
      %v265 = vld [vmem:[%s264] sm:$0xf]
      %vm266 = vcmask 31744
      %v268 = vsel %vm266, %v232, 0
      %v271 = vsel %vm266, %v233, 0
      %v274 = vsel %vm266, %v234, 0
      %v277 = vsel %vm266, %v235, 0
      %v280 = vsel %vm266, %v236, 0
      %v283 = vsel %vm266, %v237, 0
      %v286 = vsel %vm266, %v238, 0
      %v289 = vsel %vm266, %v239, 0
      %v292 = vsel %vm266, %v240, 0
      %v295 = vsel %vm266, %v241, 0
      %v298 = vsel %vm266, %v242, 0
      %v301 = vsel %vm266, %v243, 0
      %v304 = vsel %vm266, %v244, 0
      %v307 = vsel %vm266, %v245, 0
      %v310 = vsel %vm266, %v246, 0
      %v313 = vsel %vm266, %v247, 0
      %v316 = vsel %vm266, %v248, 0
      %v319 = vsel %vm266, %v249, 0
      %v322 = vsel %vm266, %v250, 0
      %v325 = vsel %vm266, %v251, 0
      %v328 = vsel %vm266, %v252, 0
      %v331 = vsel %vm266, %v253, 0
      %v334 = vsel %vm266, %v254, 0
      %v337 = vsel %vm266, %v255, 0
      %v340 = vsel %vm266, %v256, 0
      %v343 = vsel %vm266, %v257, 0
      %v346 = vsel %vm266, %v258, 0
      %v349 = vsel %vm266, %v259, 0
      %v352 = vsel %vm266, %v260, 0
      %v355 = vsel %vm266, %v261, 0
      %v358 = vsel %vm266, %v262, 0
      %v361 = vsel %vm266, %v263, 0
      %vm363 = vcmask 1043456
      %v365 = vsel %vm363, %v265, 0
      %367 = vmatpush.msra.mxu0 0.0
      %368 = vmatpush.msra.mxu0 0.0
      %369 = vmatpush.msra.mxu0 0.0
      %370 = vmatpush.msra.mxu0 0.0
      %371 = vmatpush.msra.mxu0 0.0
      %372 = vmatpush.msra.mxu0 0.0
      %373 = vmatpush.msra.mxu0 0.0
      %374 = vmatpush.msra.mxu0 0.0
      %375 = vmatpush.msra.mxu0 0.0
      %376 = vmatpush.msra.mxu0 0.0
      %377 = vmatpush.msra.mxu0 0.0
      %378 = vmatpush.msra.mxu0 0.0
      %379 = vmatpush.msra.mxu0 0.0
      %380 = vmatpush.msra.mxu0 0.0
      %381 = vmatpush.msra.mxu0 0.0
      %382 = vmatpush.msra.mxu0 %v365
      %383 = vmatmul.f32.gmra.mxu0 %v268
      %v384 = vpop.f32.mrf.mxu0
      %v385 = vadd.f32 0.0, %v384
      %386 = vmatmul.f32.gmra.mxu0 %v271
      %v387 = vpop.f32.mrf.mxu0
      %v388 = vadd.f32 0.0, %v387
      %389 = vmatmul.f32.gmra.mxu0 %v274
      %v390 = vpop.f32.mrf.mxu0
      %v391 = vadd.f32 0.0, %v390
      %392 = vmatmul.f32.gmra.mxu0 %v277
      %v393 = vpop.f32.mrf.mxu0
      %v394 = vadd.f32 0.0, %v393
      %395 = vmatmul.f32.gmra.mxu0 %v280
      %v396 = vpop.f32.mrf.mxu0
      %v397 = vadd.f32 0.0, %v396
      %398 = vmatmul.f32.gmra.mxu0 %v283
      %v399 = vpop.f32.mrf.mxu0
      %v400 = vadd.f32 0.0, %v399
      %401 = vmatmul.f32.gmra.mxu0 %v286
      %v402 = vpop.f32.mrf.mxu0
      %v403 = vadd.f32 0.0, %v402
      %404 = vmatmul.f32.gmra.mxu0 %v289
      %v405 = vpop.f32.mrf.mxu0
      %v406 = vadd.f32 0.0, %v405
      %407 = vmatmul.f32.gmra.mxu0 %v292
      %v408 = vpop.f32.mrf.mxu0
      %v409 = vadd.f32 0.0, %v408
      %410 = vmatmul.f32.gmra.mxu0 %v295
      %v411 = vpop.f32.mrf.mxu0
      %v412 = vadd.f32 0.0, %v411
      %413 = vmatmul.f32.gmra.mxu0 %v298
      %v414 = vpop.f32.mrf.mxu0
      %v415 = vadd.f32 0.0, %v414
      %416 = vmatmul.f32.gmra.mxu0 %v301
      %v417 = vpop.f32.mrf.mxu0
      %v418 = vadd.f32 0.0, %v417
      %419 = vmatmul.f32.gmra.mxu0 %v304
      %v420 = vpop.f32.mrf.mxu0
      %v421 = vadd.f32 0.0, %v420
      %422 = vmatmul.f32.gmra.mxu0 %v307
      %v423 = vpop.f32.mrf.mxu0
      %v424 = vadd.f32 0.0, %v423
      %425 = vmatmul.f32.gmra.mxu0 %v310
      %v426 = vpop.f32.mrf.mxu0
      %v427 = vadd.f32 0.0, %v426
      %428 = vmatmul.f32.gmra.mxu0 %v313
      %v429 = vpop.f32.mrf.mxu0
      %v430 = vadd.f32 0.0, %v429
      %431 = vmatmul.f32.gmra.mxu0 %v316
      %v432 = vpop.f32.mrf.mxu0
      %v433 = vadd.f32 0.0, %v432
      %434 = vmatmul.f32.gmra.mxu0 %v319
      %v435 = vpop.f32.mrf.mxu0
      %v436 = vadd.f32 0.0, %v435
      %437 = vmatmul.f32.gmra.mxu0 %v322
      %v438 = vpop.f32.mrf.mxu0
      %v439 = vadd.f32 0.0, %v438
      %440 = vmatmul.f32.gmra.mxu0 %v325
      %v441 = vpop.f32.mrf.mxu0
      %v442 = vadd.f32 0.0, %v441
      %443 = vmatmul.f32.gmra.mxu0 %v328
      %v444 = vpop.f32.mrf.mxu0
      %v445 = vadd.f32 0.0, %v444
      %446 = vmatmul.f32.gmra.mxu0 %v331
      %v447 = vpop.f32.mrf.mxu0
      %v448 = vadd.f32 0.0, %v447
      %449 = vmatmul.f32.gmra.mxu0 %v334
      %v450 = vpop.f32.mrf.mxu0
      %v451 = vadd.f32 0.0, %v450
      %452 = vmatmul.f32.gmra.mxu0 %v337
      %v453 = vpop.f32.mrf.mxu0
      %v454 = vadd.f32 0.0, %v453
      %455 = vmatmul.f32.gmra.mxu0 %v340
      %v456 = vpop.f32.mrf.mxu0
      %v457 = vadd.f32 0.0, %v456
      %458 = vmatmul.f32.gmra.mxu0 %v343
      %v459 = vpop.f32.mrf.mxu0
      %v460 = vadd.f32 0.0, %v459
      %461 = vmatmul.f32.gmra.mxu0 %v346
      %v462 = vpop.f32.mrf.mxu0
      %v463 = vadd.f32 0.0, %v462
      %464 = vmatmul.f32.gmra.mxu0 %v349
      %v465 = vpop.f32.mrf.mxu0
      %v466 = vadd.f32 0.0, %v465
      %467 = vmatmul.f32.gmra.mxu0 %v352
      %v468 = vpop.f32.mrf.mxu0
      %v469 = vadd.f32 0.0, %v468
      %470 = vmatmul.f32.gmra.mxu0 %v355
      %v471 = vpop.f32.mrf.mxu0
      %v472 = vadd.f32 0.0, %v471
      %473 = vmatmul.f32.gmra.mxu0 %v358
      %v474 = vpop.f32.mrf.mxu0
      %v475 = vadd.f32 0.0, %v474
      %476 = vmatmul.f32.gmra.mxu0 %v361
      %v477 = vpop.f32.mrf.mxu0
      %v478 = vadd.f32 0.0, %v477
      %479 = vdwg.mxu0
      %v481 = vsel %vm266, %v198, 0
      %v484 = vsel %vm266, %v199, 0
      %v487 = vsel %vm266, %v200, 0
      %v490 = vsel %vm266, %v201, 0
      %v493 = vsel %vm266, %v202, 0
      %v496 = vsel %vm266, %v203, 0
      %v499 = vsel %vm266, %v204, 0
      %v502 = vsel %vm266, %v205, 0
      %v505 = vsel %vm266, %v206, 0
      %v508 = vsel %vm266, %v207, 0
      %v511 = vsel %vm266, %v208, 0
      %v514 = vsel %vm266, %v209, 0
      %v517 = vsel %vm266, %v210, 0
      %v520 = vsel %vm266, %v211, 0
      %v523 = vsel %vm266, %v212, 0
      %v526 = vsel %vm266, %v213, 0
      %v529 = vsel %vm266, %v214, 0
      %v532 = vsel %vm266, %v215, 0
      %v535 = vsel %vm266, %v216, 0
      %v538 = vsel %vm266, %v217, 0
      %v541 = vsel %vm266, %v218, 0
      %v544 = vsel %vm266, %v219, 0
      %v547 = vsel %vm266, %v220, 0
      %v550 = vsel %vm266, %v221, 0
      %v553 = vsel %vm266, %v222, 0
      %v556 = vsel %vm266, %v223, 0
      %v559 = vsel %vm266, %v224, 0
      %v562 = vsel %vm266, %v225, 0
      %v565 = vsel %vm266, %v226, 0
      %v568 = vsel %vm266, %v227, 0
      %v571 = vsel %vm266, %v228, 0
      %v574 = vsel %vm266, %v229, 0
      %v577 = vsel %vm363, %v230, 0
      %579 = vmatpush.msra.mxu0 0.0
      %580 = vmatpush.msra.mxu0 0.0
      %581 = vmatpush.msra.mxu0 0.0
      %582 = vmatpush.msra.mxu0 0.0
      %583 = vmatpush.msra.mxu0 0.0
      %584 = vmatpush.msra.mxu0 0.0
      %585 = vmatpush.msra.mxu0 0.0
      %586 = vmatpush.msra.mxu0 0.0
      %587 = vmatpush.msra.mxu0 0.0
      %588 = vmatpush.msra.mxu0 0.0
      %589 = vmatpush.msra.mxu0 0.0
      %590 = vmatpush.msra.mxu0 0.0
      %591 = vmatpush.msra.mxu0 0.0
      %592 = vmatpush.msra.mxu0 0.0
      %593 = vmatpush.msra.mxu0 0.0
      %594 = vmatpush.msra.mxu0 %v577
      %595 = vmatmul.f32.gmra.mxu0 %v481
      %v596 = vpop.f32.mrf.mxu0
      %v597 = vadd.f32 %v385, %v596
      %598 = vmatmul.f32.gmra.mxu0 %v484
      %v599 = vpop.f32.mrf.mxu0
      %v600 = vadd.f32 %v388, %v599
      %601 = vmatmul.f32.gmra.mxu0 %v487
      %v602 = vpop.f32.mrf.mxu0
      %v603 = vadd.f32 %v391, %v602
      %604 = vmatmul.f32.gmra.mxu0 %v490
      %v605 = vpop.f32.mrf.mxu0
      %v606 = vadd.f32 %v394, %v605
      %607 = vmatmul.f32.gmra.mxu0 %v493
      %v608 = vpop.f32.mrf.mxu0
      %v609 = vadd.f32 %v397, %v608
      %610 = vmatmul.f32.gmra.mxu0 %v496
      %v611 = vpop.f32.mrf.mxu0
      %v612 = vadd.f32 %v400, %v611
      %613 = vmatmul.f32.gmra.mxu0 %v499
      %v614 = vpop.f32.mrf.mxu0
      %v615 = vadd.f32 %v403, %v614
      %616 = vmatmul.f32.gmra.mxu0 %v502
      %v617 = vpop.f32.mrf.mxu0
      %v618 = vadd.f32 %v406, %v617
      %619 = vmatmul.f32.gmra.mxu0 %v505
      %v620 = vpop.f32.mrf.mxu0
      %v621 = vadd.f32 %v409, %v620
      %622 = vmatmul.f32.gmra.mxu0 %v508
      %v623 = vpop.f32.mrf.mxu0
      %v624 = vadd.f32 %v412, %v623
      %625 = vmatmul.f32.gmra.mxu0 %v511
      %v626 = vpop.f32.mrf.mxu0
      %v627 = vadd.f32 %v415, %v626
      %628 = vmatmul.f32.gmra.mxu0 %v514
      %v629 = vpop.f32.mrf.mxu0
      %v630 = vadd.f32 %v418, %v629
      %631 = vmatmul.f32.gmra.mxu0 %v517
      %v632 = vpop.f32.mrf.mxu0
      %v633 = vadd.f32 %v421, %v632
      %634 = vmatmul.f32.gmra.mxu0 %v520
      %v635 = vpop.f32.mrf.mxu0
      %v636 = vadd.f32 %v424, %v635
      %637 = vmatmul.f32.gmra.mxu0 %v523
      %v638 = vpop.f32.mrf.mxu0
      %v639 = vadd.f32 %v427, %v638
      %640 = vmatmul.f32.gmra.mxu0 %v526
      %v641 = vpop.f32.mrf.mxu0
      %v642 = vadd.f32 %v430, %v641
      %643 = vmatmul.f32.gmra.mxu0 %v529
      %v644 = vpop.f32.mrf.mxu0
      %v645 = vadd.f32 %v433, %v644
      %646 = vmatmul.f32.gmra.mxu0 %v532
      %v647 = vpop.f32.mrf.mxu0
      %v648 = vadd.f32 %v436, %v647
      %649 = vmatmul.f32.gmra.mxu0 %v535
      %v650 = vpop.f32.mrf.mxu0
      %v651 = vadd.f32 %v439, %v650
      %652 = vmatmul.f32.gmra.mxu0 %v538
      %v653 = vpop.f32.mrf.mxu0
      %v654 = vadd.f32 %v442, %v653
      %655 = vmatmul.f32.gmra.mxu0 %v541
      %v656 = vpop.f32.mrf.mxu0
      %v657 = vadd.f32 %v445, %v656
      %658 = vmatmul.f32.gmra.mxu0 %v544
      %v659 = vpop.f32.mrf.mxu0
      %v660 = vadd.f32 %v448, %v659
      %661 = vmatmul.f32.gmra.mxu0 %v547
      %v662 = vpop.f32.mrf.mxu0
      %v663 = vadd.f32 %v451, %v662
      %664 = vmatmul.f32.gmra.mxu0 %v550
      %v665 = vpop.f32.mrf.mxu0
      %v666 = vadd.f32 %v454, %v665
      %667 = vmatmul.f32.gmra.mxu0 %v553
      %v668 = vpop.f32.mrf.mxu0
      %v669 = vadd.f32 %v457, %v668
      %670 = vmatmul.f32.gmra.mxu0 %v556
      %v671 = vpop.f32.mrf.mxu0
      %v672 = vadd.f32 %v460, %v671
      %673 = vmatmul.f32.gmra.mxu0 %v559
      %v674 = vpop.f32.mrf.mxu0
      %v675 = vadd.f32 %v463, %v674
      %676 = vmatmul.f32.gmra.mxu0 %v562
      %v677 = vpop.f32.mrf.mxu0
      %v678 = vadd.f32 %v466, %v677
      %679 = vmatmul.f32.gmra.mxu0 %v565
      %v680 = vpop.f32.mrf.mxu0
      %v681 = vadd.f32 %v469, %v680
      %682 = vmatmul.f32.gmra.mxu0 %v568
      %v683 = vpop.f32.mrf.mxu0
      %v684 = vadd.f32 %v472, %v683
      %685 = vmatmul.f32.gmra.mxu0 %v571
      %v686 = vpop.f32.mrf.mxu0
      %v687 = vadd.f32 %v475, %v686
      %688 = vmatmul.f32.gmra.mxu0 %v574
      %v689 = vpop.f32.mrf.mxu0
      %v690 = vadd.f32 %v478, %v689
      %691 = vdwg.mxu0
      %s692 = scalar_lea.vmem %s192, 576
      %v693 = vld [vmem:[%s692] sm:$0xff]
      %v694 = vld [vmem:[%s692 + $0x8] sm:$0xff]
      %v695 = vld [vmem:[%s692 + $0x10] sm:$0xff]
      %v696 = vld [vmem:[%s692 + $0x18] sm:$0xff]
      %v697 = vld [vmem:[%s692 + $0x20] sm:$0xff]
      %v698 = vld [vmem:[%s692 + $0x28] sm:$0xff]
      %v699 = vld [vmem:[%s692 + $0x30] sm:$0xff]
      %v700 = vld [vmem:[%s692 + $0x38] sm:$0xff]
      %v701 = vld [vmem:[%s692 + $0x40] sm:$0xff]
      %v702 = vld [vmem:[%s692 + $0x48] sm:$0xff]
      %v703 = vld [vmem:[%s692 + $0x50] sm:$0xff]
      %v704 = vld [vmem:[%s692 + $0x58] sm:$0xff]
      %v705 = vld [vmem:[%s692 + $0x60] sm:$0xff]
      %v706 = vld [vmem:[%s692 + $0x68] sm:$0xff]
      %v707 = vld [vmem:[%s692 + $0x70] sm:$0xff]
      %v708 = vld [vmem:[%s692 + $0x78] sm:$0xff]
      %v709 = vld [vmem:[%s692 + $0x80] sm:$0xff]
      %v710 = vld [vmem:[%s692 + $0x88] sm:$0xff]
      %v711 = vld [vmem:[%s692 + $0x90] sm:$0xff]
      %v712 = vld [vmem:[%s692 + $0x98] sm:$0xff]
      %v713 = vld [vmem:[%s692 + $0xa0] sm:$0xff]
      %v714 = vld [vmem:[%s692 + $0xa8] sm:$0xff]
      %v715 = vld [vmem:[%s692 + $0xb0] sm:$0xff]
      %v716 = vld [vmem:[%s692 + $0xb8] sm:$0xff]
      %v717 = vld [vmem:[%s692 + $0xc0] sm:$0xff]
      %v718 = vld [vmem:[%s692 + $0xc8] sm:$0xff]
      %v719 = vld [vmem:[%s692 + $0xd0] sm:$0xff]
      %v720 = vld [vmem:[%s692 + $0xd8] sm:$0xff]
      %v721 = vld [vmem:[%s692 + $0xe0] sm:$0xff]
      %v722 = vld [vmem:[%s692 + $0xe8] sm:$0xff]
      %v723 = vld [vmem:[%s692 + $0xf0] sm:$0xff]
      %v724 = vld [vmem:[%s692 + $0xf8] sm:$0xff]
      %s725 = scalar_lea.vmem %s1, 8
      %v726 = vld [vmem:[%s725] sm:$0xf]
      %v728 = vsel %vm266, %v693, 0
      %v731 = vsel %vm266, %v694, 0
      %v734 = vsel %vm266, %v695, 0
      %v737 = vsel %vm266, %v696, 0
      %v740 = vsel %vm266, %v697, 0
      %v743 = vsel %vm266, %v698, 0
      %v746 = vsel %vm266, %v699, 0
      %v749 = vsel %vm266, %v700, 0
      %v752 = vsel %vm266, %v701, 0
      %v755 = vsel %vm266, %v702, 0
      %v758 = vsel %vm266, %v703, 0
      %v761 = vsel %vm266, %v704, 0
      %v764 = vsel %vm266, %v705, 0
      %v767 = vsel %vm266, %v706, 0
      %v770 = vsel %vm266, %v707, 0
      %v773 = vsel %vm266, %v708, 0
      %v776 = vsel %vm266, %v709, 0
      %v779 = vsel %vm266, %v710, 0
      %v782 = vsel %vm266, %v711, 0
      %v785 = vsel %vm266, %v712, 0
      %v788 = vsel %vm266, %v713, 0
      %v791 = vsel %vm266, %v714, 0
      %v794 = vsel %vm266, %v715, 0
      %v797 = vsel %vm266, %v716, 0
      %v800 = vsel %vm266, %v717, 0
      %v803 = vsel %vm266, %v718, 0
      %v806 = vsel %vm266, %v719, 0
      %v809 = vsel %vm266, %v720, 0
      %v812 = vsel %vm266, %v721, 0
      %v815 = vsel %vm266, %v722, 0
      %v818 = vsel %vm266, %v723, 0
      %v821 = vsel %vm266, %v724, 0
      %v824 = vsel %vm363, %v726, 0
      %826 = vmatpush.msra.mxu0 0.0
      %827 = vmatpush.msra.mxu0 0.0
      %828 = vmatpush.msra.mxu0 0.0
      %829 = vmatpush.msra.mxu0 0.0
      %830 = vmatpush.msra.mxu0 0.0
      %831 = vmatpush.msra.mxu0 0.0
      %832 = vmatpush.msra.mxu0 0.0
      %833 = vmatpush.msra.mxu0 0.0
      %834 = vmatpush.msra.mxu0 0.0
      %835 = vmatpush.msra.mxu0 0.0
      %836 = vmatpush.msra.mxu0 0.0
      %837 = vmatpush.msra.mxu0 0.0
      %838 = vmatpush.msra.mxu0 0.0
      %839 = vmatpush.msra.mxu0 0.0
      %840 = vmatpush.msra.mxu0 0.0
      %841 = vmatpush.msra.mxu0 %v824
      %842 = vmatmul.f32.gmra.mxu0 %v728
      %v843 = vpop.f32.mrf.mxu0
      %v844 = vadd.f32 0.0, %v843
      %845 = vmatmul.f32.gmra.mxu0 %v731
      %v846 = vpop.f32.mrf.mxu0
      %v847 = vadd.f32 0.0, %v846
      %848 = vmatmul.f32.gmra.mxu0 %v734
      %v849 = vpop.f32.mrf.mxu0
      %v850 = vadd.f32 0.0, %v849
      %851 = vmatmul.f32.gmra.mxu0 %v737
      %v852 = vpop.f32.mrf.mxu0
      %v853 = vadd.f32 0.0, %v852
      %854 = vmatmul.f32.gmra.mxu0 %v740
      %v855 = vpop.f32.mrf.mxu0
      %v856 = vadd.f32 0.0, %v855
      %857 = vmatmul.f32.gmra.mxu0 %v743
      %v858 = vpop.f32.mrf.mxu0
      %v859 = vadd.f32 0.0, %v858
      %860 = vmatmul.f32.gmra.mxu0 %v746
      %v861 = vpop.f32.mrf.mxu0
      %v862 = vadd.f32 0.0, %v861
      %863 = vmatmul.f32.gmra.mxu0 %v749
      %v864 = vpop.f32.mrf.mxu0
      %v865 = vadd.f32 0.0, %v864
      %866 = vmatmul.f32.gmra.mxu0 %v752
      %v867 = vpop.f32.mrf.mxu0
      %v868 = vadd.f32 0.0, %v867
      %869 = vmatmul.f32.gmra.mxu0 %v755
      %v870 = vpop.f32.mrf.mxu0
      %v871 = vadd.f32 0.0, %v870
      %872 = vmatmul.f32.gmra.mxu0 %v758
      %v873 = vpop.f32.mrf.mxu0
      %v874 = vadd.f32 0.0, %v873
      %875 = vmatmul.f32.gmra.mxu0 %v761
      %v876 = vpop.f32.mrf.mxu0
      %v877 = vadd.f32 0.0, %v876
      %878 = vmatmul.f32.gmra.mxu0 %v764
      %v879 = vpop.f32.mrf.mxu0
      %v880 = vadd.f32 0.0, %v879
      %881 = vmatmul.f32.gmra.mxu0 %v767
      %v882 = vpop.f32.mrf.mxu0
      %v883 = vadd.f32 0.0, %v882
      %884 = vmatmul.f32.gmra.mxu0 %v770
      %v885 = vpop.f32.mrf.mxu0
      %v886 = vadd.f32 0.0, %v885
      %887 = vmatmul.f32.gmra.mxu0 %v773
      %v888 = vpop.f32.mrf.mxu0
      %v889 = vadd.f32 0.0, %v888
      %890 = vmatmul.f32.gmra.mxu0 %v776
      %v891 = vpop.f32.mrf.mxu0
      %v892 = vadd.f32 0.0, %v891
      %893 = vmatmul.f32.gmra.mxu0 %v779
      %v894 = vpop.f32.mrf.mxu0
      %v895 = vadd.f32 0.0, %v894
      %896 = vmatmul.f32.gmra.mxu0 %v782
      %v897 = vpop.f32.mrf.mxu0
      %v898 = vadd.f32 0.0, %v897
      %899 = vmatmul.f32.gmra.mxu0 %v785
      %v900 = vpop.f32.mrf.mxu0
      %v901 = vadd.f32 0.0, %v900
      %902 = vmatmul.f32.gmra.mxu0 %v788
      %v903 = vpop.f32.mrf.mxu0
      %v904 = vadd.f32 0.0, %v903
      %905 = vmatmul.f32.gmra.mxu0 %v791
      %v906 = vpop.f32.mrf.mxu0
      %v907 = vadd.f32 0.0, %v906
      %908 = vmatmul.f32.gmra.mxu0 %v794
      %v909 = vpop.f32.mrf.mxu0
      %v910 = vadd.f32 0.0, %v909
      %911 = vmatmul.f32.gmra.mxu0 %v797
      %v912 = vpop.f32.mrf.mxu0
      %v913 = vadd.f32 0.0, %v912
      %914 = vmatmul.f32.gmra.mxu0 %v800
      %v915 = vpop.f32.mrf.mxu0
      %v916 = vadd.f32 0.0, %v915
      %917 = vmatmul.f32.gmra.mxu0 %v803
      %v918 = vpop.f32.mrf.mxu0
      %v919 = vadd.f32 0.0, %v918
      %920 = vmatmul.f32.gmra.mxu0 %v806
      %v921 = vpop.f32.mrf.mxu0
      %v922 = vadd.f32 0.0, %v921
      %923 = vmatmul.f32.gmra.mxu0 %v809
      %v924 = vpop.f32.mrf.mxu0
      %v925 = vadd.f32 0.0, %v924
      %926 = vmatmul.f32.gmra.mxu0 %v812
      %v927 = vpop.f32.mrf.mxu0
      %v928 = vadd.f32 0.0, %v927
      %929 = vmatmul.f32.gmra.mxu0 %v815
      %v930 = vpop.f32.mrf.mxu0
      %v931 = vadd.f32 0.0, %v930
      %932 = vmatmul.f32.gmra.mxu0 %v818
      %v933 = vpop.f32.mrf.mxu0
      %v934 = vadd.f32 0.0, %v933
      %935 = vmatmul.f32.gmra.mxu0 %v821
      %v936 = vpop.f32.mrf.mxu0
      %v937 = vadd.f32 0.0, %v936
      %938 = vdwg.mxu0
      %v939 = vadd.f32 %v597, %v844
      %v940 = vadd.f32 %v600, %v847
      %v941 = vadd.f32 %v603, %v850
      %v942 = vadd.f32 %v606, %v853
      %v943 = vadd.f32 %v609, %v856
      %v944 = vadd.f32 %v612, %v859
      %v945 = vadd.f32 %v615, %v862
      %v946 = vadd.f32 %v618, %v865
      %v947 = vadd.f32 %v621, %v868
      %v948 = vadd.f32 %v624, %v871
      %v949 = vadd.f32 %v627, %v874
      %v950 = vadd.f32 %v630, %v877
      %v951 = vadd.f32 %v633, %v880
      %v952 = vadd.f32 %v636, %v883
      %v953 = vadd.f32 %v639, %v886
      %v954 = vadd.f32 %v642, %v889
      %v955 = vadd.f32 %v645, %v892
      %v956 = vadd.f32 %v648, %v895
      %v957 = vadd.f32 %v651, %v898
      %v958 = vadd.f32 %v654, %v901
      %v959 = vadd.f32 %v657, %v904
      %v960 = vadd.f32 %v660, %v907
      %v961 = vadd.f32 %v663, %v910
      %v962 = vadd.f32 %v666, %v913
      %v963 = vadd.f32 %v669, %v916
      %v964 = vadd.f32 %v672, %v919
      %v965 = vadd.f32 %v675, %v922
      %v966 = vadd.f32 %v678, %v925
      %v967 = vadd.f32 %v681, %v928
      %v968 = vadd.f32 %v684, %v931
      %v969 = vadd.f32 %v687, %v934
      %v970 = vadd.f32 %v690, %v937
      %v971 = vld [vmem:[%s192 + $0x10] sm:$0xff]
      %v972 = vld [vmem:[%s192 + $0x18] sm:$0xff]
      %v973 = vld [vmem:[%s192 + $0x20] sm:$0xff]
      %v974 = vld [vmem:[%s192 + $0x28] sm:$0xff]
      %v975 = vld [vmem:[%s192 + $0x30] sm:$0xff]
      %v976 = vld [vmem:[%s192 + $0x38] sm:$0xff]
      %v977 = vld [vmem:[%s192 + $0x40] sm:$0xff]
      %v978 = vld [vmem:[%s192 + $0x48] sm:$0xff]
      %v979 = vld [vmem:[%s192 + $0x50] sm:$0xff]
      %v980 = vld [vmem:[%s192 + $0x58] sm:$0xff]
      %v981 = vld [vmem:[%s192 + $0x60] sm:$0xff]
      %v982 = vld [vmem:[%s192 + $0x68] sm:$0xff]
      %v983 = vld [vmem:[%s192 + $0x70] sm:$0xff]
      %v984 = vld [vmem:[%s192 + $0x78] sm:$0xff]
      %v985 = vld [vmem:[%s192 + $0x80] sm:$0xff]
      %v986 = vld [vmem:[%s192 + $0x88] sm:$0xff]
      %v987 = vld [vmem:[%s192 + $0x90] sm:$0xff]
      %v988 = vld [vmem:[%s192 + $0x98] sm:$0xff]
      %v989 = vld [vmem:[%s192 + $0xa0] sm:$0xff]
      %v990 = vld [vmem:[%s192 + $0xa8] sm:$0xff]
      %v991 = vld [vmem:[%s192 + $0xb0] sm:$0xff]
      %v992 = vld [vmem:[%s192 + $0xb8] sm:$0xff]
      %v993 = vld [vmem:[%s192 + $0xc0] sm:$0xff]
      %v994 = vld [vmem:[%s192 + $0xc8] sm:$0xff]
      %v995 = vld [vmem:[%s192 + $0xd0] sm:$0xff]
      %v996 = vld [vmem:[%s192 + $0xd8] sm:$0xff]
      %v997 = vld [vmem:[%s192 + $0xe0] sm:$0xff]
      %v998 = vld [vmem:[%s192 + $0xe8] sm:$0xff]
      %v999 = vld [vmem:[%s192 + $0xf0] sm:$0xff]
      %v1000 = vld [vmem:[%s192 + $0xf8] sm:$0xff]
      %v1001 = vld [vmem:[%s192 + $0x100] sm:$0xff]
      %v1002 = vld [vmem:[%s192 + $0x108] sm:$0xff]
      %s1003 = scalar_lea.vmem %s1, 12
      %v1004 = vld [vmem:[%s1003] sm:$0xf]
      %v1006 = vsel %vm266, %v971, 0
      %v1009 = vsel %vm266, %v972, 0
      %v1012 = vsel %vm266, %v973, 0
      %v1015 = vsel %vm266, %v974, 0
      %v1018 = vsel %vm266, %v975, 0
      %v1021 = vsel %vm266, %v976, 0
      %v1024 = vsel %vm266, %v977, 0
      %v1027 = vsel %vm266, %v978, 0
      %v1030 = vsel %vm266, %v979, 0
      %v1033 = vsel %vm266, %v980, 0
      %v1036 = vsel %vm266, %v981, 0
      %v1039 = vsel %vm266, %v982, 0
      %v1042 = vsel %vm266, %v983, 0
      %v1045 = vsel %vm266, %v984, 0
      %v1048 = vsel %vm266, %v985, 0
      %v1051 = vsel %vm266, %v986, 0
      %v1054 = vsel %vm266, %v987, 0
      %v1057 = vsel %vm266, %v988, 0
      %v1060 = vsel %vm266, %v989, 0
      %v1063 = vsel %vm266, %v990, 0
      %v1066 = vsel %vm266, %v991, 0
      %v1069 = vsel %vm266, %v992, 0
      %v1072 = vsel %vm266, %v993, 0
      %v1075 = vsel %vm266, %v994, 0
      %v1078 = vsel %vm266, %v995, 0
      %v1081 = vsel %vm266, %v996, 0
      %v1084 = vsel %vm266, %v997, 0
      %v1087 = vsel %vm266, %v998, 0
      %v1090 = vsel %vm266, %v999, 0
      %v1093 = vsel %vm266, %v1000, 0
      %v1096 = vsel %vm266, %v1001, 0
      %v1099 = vsel %vm266, %v1002, 0
      %v1102 = vsel %vm363, %v1004, 0
      %1104 = vmatpush.msra.mxu0 0.0
      %1105 = vmatpush.msra.mxu0 0.0
      %1106 = vmatpush.msra.mxu0 0.0
      %1107 = vmatpush.msra.mxu0 0.0
      %1108 = vmatpush.msra.mxu0 0.0
      %1109 = vmatpush.msra.mxu0 0.0
      %1110 = vmatpush.msra.mxu0 0.0
      %1111 = vmatpush.msra.mxu0 0.0
      %1112 = vmatpush.msra.mxu0 0.0
      %1113 = vmatpush.msra.mxu0 0.0
      %1114 = vmatpush.msra.mxu0 0.0
      %1115 = vmatpush.msra.mxu0 0.0
      %1116 = vmatpush.msra.mxu0 0.0
      %1117 = vmatpush.msra.mxu0 0.0
      %1118 = vmatpush.msra.mxu0 0.0
      %1119 = vmatpush.msra.mxu0 %v1102
      %1120 = vmatmul.f32.gmra.mxu0 %v1006
      %v1121 = vpop.f32.mrf.mxu0
      %v1122 = vadd.f32 0.0, %v1121
      %1123 = vmatmul.f32.gmra.mxu0 %v1009
      %v1124 = vpop.f32.mrf.mxu0
      %v1125 = vadd.f32 0.0, %v1124
      %1126 = vmatmul.f32.gmra.mxu0 %v1012
      %v1127 = vpop.f32.mrf.mxu0
      %v1128 = vadd.f32 0.0, %v1127
      %1129 = vmatmul.f32.gmra.mxu0 %v1015
      %v1130 = vpop.f32.mrf.mxu0
      %v1131 = vadd.f32 0.0, %v1130
      %1132 = vmatmul.f32.gmra.mxu0 %v1018
      %v1133 = vpop.f32.mrf.mxu0
      %v1134 = vadd.f32 0.0, %v1133
      %1135 = vmatmul.f32.gmra.mxu0 %v1021
      %v1136 = vpop.f32.mrf.mxu0
      %v1137 = vadd.f32 0.0, %v1136
      %1138 = vmatmul.f32.gmra.mxu0 %v1024
      %v1139 = vpop.f32.mrf.mxu0
      %v1140 = vadd.f32 0.0, %v1139
      %1141 = vmatmul.f32.gmra.mxu0 %v1027
      %v1142 = vpop.f32.mrf.mxu0
      %v1143 = vadd.f32 0.0, %v1142
      %1144 = vmatmul.f32.gmra.mxu0 %v1030
      %v1145 = vpop.f32.mrf.mxu0
      %v1146 = vadd.f32 0.0, %v1145
      %1147 = vmatmul.f32.gmra.mxu0 %v1033
      %v1148 = vpop.f32.mrf.mxu0
      %v1149 = vadd.f32 0.0, %v1148
      %1150 = vmatmul.f32.gmra.mxu0 %v1036
      %v1151 = vpop.f32.mrf.mxu0
      %v1152 = vadd.f32 0.0, %v1151
      %1153 = vmatmul.f32.gmra.mxu0 %v1039
      %v1154 = vpop.f32.mrf.mxu0
      %v1155 = vadd.f32 0.0, %v1154
      %1156 = vmatmul.f32.gmra.mxu0 %v1042
      %v1157 = vpop.f32.mrf.mxu0
      %v1158 = vadd.f32 0.0, %v1157
      %1159 = vmatmul.f32.gmra.mxu0 %v1045
      %v1160 = vpop.f32.mrf.mxu0
      %v1161 = vadd.f32 0.0, %v1160
      %1162 = vmatmul.f32.gmra.mxu0 %v1048
      %v1163 = vpop.f32.mrf.mxu0
      %v1164 = vadd.f32 0.0, %v1163
      %1165 = vmatmul.f32.gmra.mxu0 %v1051
      %v1166 = vpop.f32.mrf.mxu0
      %v1167 = vadd.f32 0.0, %v1166
      %1168 = vmatmul.f32.gmra.mxu0 %v1054
      %v1169 = vpop.f32.mrf.mxu0
      %v1170 = vadd.f32 0.0, %v1169
      %1171 = vmatmul.f32.gmra.mxu0 %v1057
      %v1172 = vpop.f32.mrf.mxu0
      %v1173 = vadd.f32 0.0, %v1172
      %1174 = vmatmul.f32.gmra.mxu0 %v1060
      %v1175 = vpop.f32.mrf.mxu0
      %v1176 = vadd.f32 0.0, %v1175
      %1177 = vmatmul.f32.gmra.mxu0 %v1063
      %v1178 = vpop.f32.mrf.mxu0
      %v1179 = vadd.f32 0.0, %v1178
      %1180 = vmatmul.f32.gmra.mxu0 %v1066
      %v1181 = vpop.f32.mrf.mxu0
      %v1182 = vadd.f32 0.0, %v1181
      %1183 = vmatmul.f32.gmra.mxu0 %v1069
      %v1184 = vpop.f32.mrf.mxu0
      %v1185 = vadd.f32 0.0, %v1184
      %1186 = vmatmul.f32.gmra.mxu0 %v1072
      %v1187 = vpop.f32.mrf.mxu0
      %v1188 = vadd.f32 0.0, %v1187
      %1189 = vmatmul.f32.gmra.mxu0 %v1075
      %v1190 = vpop.f32.mrf.mxu0
      %v1191 = vadd.f32 0.0, %v1190
      %1192 = vmatmul.f32.gmra.mxu0 %v1078
      %v1193 = vpop.f32.mrf.mxu0
      %v1194 = vadd.f32 0.0, %v1193
      %1195 = vmatmul.f32.gmra.mxu0 %v1081
      %v1196 = vpop.f32.mrf.mxu0
      %v1197 = vadd.f32 0.0, %v1196
      %1198 = vmatmul.f32.gmra.mxu0 %v1084
      %v1199 = vpop.f32.mrf.mxu0
      %v1200 = vadd.f32 0.0, %v1199
      %1201 = vmatmul.f32.gmra.mxu0 %v1087
      %v1202 = vpop.f32.mrf.mxu0
      %v1203 = vadd.f32 0.0, %v1202
      %1204 = vmatmul.f32.gmra.mxu0 %v1090
      %v1205 = vpop.f32.mrf.mxu0
      %v1206 = vadd.f32 0.0, %v1205
      %1207 = vmatmul.f32.gmra.mxu0 %v1093
      %v1208 = vpop.f32.mrf.mxu0
      %v1209 = vadd.f32 0.0, %v1208
      %1210 = vmatmul.f32.gmra.mxu0 %v1096
      %v1211 = vpop.f32.mrf.mxu0
      %v1212 = vadd.f32 0.0, %v1211
      %1213 = vmatmul.f32.gmra.mxu0 %v1099
      %v1214 = vpop.f32.mrf.mxu0
      %v1215 = vadd.f32 0.0, %v1214
      %1216 = vdwg.mxu0
      %v1217 = vadd.f32 %v939, %v1122
      %v1218 = vadd.f32 %v940, %v1125
      %v1219 = vadd.f32 %v941, %v1128
      %v1220 = vadd.f32 %v942, %v1131
      %v1221 = vadd.f32 %v943, %v1134
      %v1222 = vadd.f32 %v944, %v1137
      %v1223 = vadd.f32 %v945, %v1140
      %v1224 = vadd.f32 %v946, %v1143
      %v1225 = vadd.f32 %v947, %v1146
      %v1226 = vadd.f32 %v948, %v1149
      %v1227 = vadd.f32 %v949, %v1152
      %v1228 = vadd.f32 %v950, %v1155
      %v1229 = vadd.f32 %v951, %v1158
      %v1230 = vadd.f32 %v952, %v1161
      %v1231 = vadd.f32 %v953, %v1164
      %v1232 = vadd.f32 %v954, %v1167
      %v1233 = vadd.f32 %v955, %v1170
      %v1234 = vadd.f32 %v956, %v1173
      %v1235 = vadd.f32 %v957, %v1176
      %v1236 = vadd.f32 %v958, %v1179
      %v1237 = vadd.f32 %v959, %v1182
      %v1238 = vadd.f32 %v960, %v1185
      %v1239 = vadd.f32 %v961, %v1188
      %v1240 = vadd.f32 %v962, %v1191
      %v1241 = vadd.f32 %v963, %v1194
      %v1242 = vadd.f32 %v964, %v1197
      %v1243 = vadd.f32 %v965, %v1200
      %v1244 = vadd.f32 %v966, %v1203
      %v1245 = vadd.f32 %v967, %v1206
      %v1246 = vadd.f32 %v968, %v1209
      %v1247 = vadd.f32 %v969, %v1212
      %v1248 = vadd.f32 %v970, %v1215
      %v1249 = vld [vmem:[%s231 + $0x10] sm:$0xff]
      %v1250 = vld [vmem:[%s231 + $0x18] sm:$0xff]
      %v1251 = vld [vmem:[%s231 + $0x20] sm:$0xff]
      %v1252 = vld [vmem:[%s231 + $0x28] sm:$0xff]
      %v1253 = vld [vmem:[%s231 + $0x30] sm:$0xff]
      %v1254 = vld [vmem:[%s231 + $0x38] sm:$0xff]
      %v1255 = vld [vmem:[%s231 + $0x40] sm:$0xff]
      %v1256 = vld [vmem:[%s231 + $0x48] sm:$0xff]
      %v1257 = vld [vmem:[%s231 + $0x50] sm:$0xff]
      %v1258 = vld [vmem:[%s231 + $0x58] sm:$0xff]
      %v1259 = vld [vmem:[%s231 + $0x60] sm:$0xff]
      %v1260 = vld [vmem:[%s231 + $0x68] sm:$0xff]
      %v1261 = vld [vmem:[%s231 + $0x70] sm:$0xff]
      %v1262 = vld [vmem:[%s231 + $0x78] sm:$0xff]
      %v1263 = vld [vmem:[%s231 + $0x80] sm:$0xff]
      %v1264 = vld [vmem:[%s231 + $0x88] sm:$0xff]
      %v1265 = vld [vmem:[%s231 + $0x90] sm:$0xff]
      %v1266 = vld [vmem:[%s231 + $0x98] sm:$0xff]
      %v1267 = vld [vmem:[%s231 + $0xa0] sm:$0xff]
      %v1268 = vld [vmem:[%s231 + $0xa8] sm:$0xff]
      %v1269 = vld [vmem:[%s231 + $0xb0] sm:$0xff]
      %v1270 = vld [vmem:[%s231 + $0xb8] sm:$0xff]
      %v1271 = vld [vmem:[%s231 + $0xc0] sm:$0xff]
      %v1272 = vld [vmem:[%s231 + $0xc8] sm:$0xff]
      %v1273 = vld [vmem:[%s231 + $0xd0] sm:$0xff]
      %v1274 = vld [vmem:[%s231 + $0xd8] sm:$0xff]
      %v1275 = vld [vmem:[%s231 + $0xe0] sm:$0xff]
      %v1276 = vld [vmem:[%s231 + $0xe8] sm:$0xff]
      %v1277 = vld [vmem:[%s231 + $0xf0] sm:$0xff]
      %v1278 = vld [vmem:[%s231 + $0xf8] sm:$0xff]
      %v1279 = vld [vmem:[%s231 + $0x100] sm:$0xff]
      %v1280 = vld [vmem:[%s231 + $0x108] sm:$0xff]
      %s1281 = scalar_lea.vmem %s1, 16
      %v1282 = vld [vmem:[%s1281] sm:$0xf]
      %v1284 = vsel %vm266, %v1249, 0
      %v1287 = vsel %vm266, %v1250, 0
      %v1290 = vsel %vm266, %v1251, 0
      %v1293 = vsel %vm266, %v1252, 0
      %v1296 = vsel %vm266, %v1253, 0
      %v1299 = vsel %vm266, %v1254, 0
      %v1302 = vsel %vm266, %v1255, 0
      %v1305 = vsel %vm266, %v1256, 0
      %v1308 = vsel %vm266, %v1257, 0
      %v1311 = vsel %vm266, %v1258, 0
      %v1314 = vsel %vm266, %v1259, 0
      %v1317 = vsel %vm266, %v1260, 0
      %v1320 = vsel %vm266, %v1261, 0
      %v1323 = vsel %vm266, %v1262, 0
      %v1326 = vsel %vm266, %v1263, 0
      %v1329 = vsel %vm266, %v1264, 0
      %v1332 = vsel %vm266, %v1265, 0
      %v1335 = vsel %vm266, %v1266, 0
      %v1338 = vsel %vm266, %v1267, 0
      %v1341 = vsel %vm266, %v1268, 0
      %v1344 = vsel %vm266, %v1269, 0
      %v1347 = vsel %vm266, %v1270, 0
      %v1350 = vsel %vm266, %v1271, 0
      %v1353 = vsel %vm266, %v1272, 0
      %v1356 = vsel %vm266, %v1273, 0
      %v1359 = vsel %vm266, %v1274, 0
      %v1362 = vsel %vm266, %v1275, 0
      %v1365 = vsel %vm266, %v1276, 0
      %v1368 = vsel %vm266, %v1277, 0
      %v1371 = vsel %vm266, %v1278, 0
      %v1374 = vsel %vm266, %v1279, 0
      %v1377 = vsel %vm266, %v1280, 0
      %v1380 = vsel %vm363, %v1282, 0
      %1382 = vmatpush.msra.mxu0 0.0
      %1383 = vmatpush.msra.mxu0 0.0
      %1384 = vmatpush.msra.mxu0 0.0
      %1385 = vmatpush.msra.mxu0 0.0
      %1386 = vmatpush.msra.mxu0 0.0
      %1387 = vmatpush.msra.mxu0 0.0
      %1388 = vmatpush.msra.mxu0 0.0
      %1389 = vmatpush.msra.mxu0 0.0
      %1390 = vmatpush.msra.mxu0 0.0
      %1391 = vmatpush.msra.mxu0 0.0
      %1392 = vmatpush.msra.mxu0 0.0
      %1393 = vmatpush.msra.mxu0 0.0
      %1394 = vmatpush.msra.mxu0 0.0
      %1395 = vmatpush.msra.mxu0 0.0
      %1396 = vmatpush.msra.mxu0 0.0
      %1397 = vmatpush.msra.mxu0 %v1380
      %1398 = vmatmul.f32.gmra.mxu0 %v1284
      %v1399 = vpop.f32.mrf.mxu0
      %v1400 = vadd.f32 0.0, %v1399
      %1401 = vmatmul.f32.gmra.mxu0 %v1287
      %v1402 = vpop.f32.mrf.mxu0
      %v1403 = vadd.f32 0.0, %v1402
      %1404 = vmatmul.f32.gmra.mxu0 %v1290
      %v1405 = vpop.f32.mrf.mxu0
      %v1406 = vadd.f32 0.0, %v1405
      %1407 = vmatmul.f32.gmra.mxu0 %v1293
      %v1408 = vpop.f32.mrf.mxu0
      %v1409 = vadd.f32 0.0, %v1408
      %1410 = vmatmul.f32.gmra.mxu0 %v1296
      %v1411 = vpop.f32.mrf.mxu0
      %v1412 = vadd.f32 0.0, %v1411
      %1413 = vmatmul.f32.gmra.mxu0 %v1299
      %v1414 = vpop.f32.mrf.mxu0
      %v1415 = vadd.f32 0.0, %v1414
      %1416 = vmatmul.f32.gmra.mxu0 %v1302
      %v1417 = vpop.f32.mrf.mxu0
      %v1418 = vadd.f32 0.0, %v1417
      %1419 = vmatmul.f32.gmra.mxu0 %v1305
      %v1420 = vpop.f32.mrf.mxu0
      %v1421 = vadd.f32 0.0, %v1420
      %1422 = vmatmul.f32.gmra.mxu0 %v1308
      %v1423 = vpop.f32.mrf.mxu0
      %v1424 = vadd.f32 0.0, %v1423
      %1425 = vmatmul.f32.gmra.mxu0 %v1311
      %v1426 = vpop.f32.mrf.mxu0
      %v1427 = vadd.f32 0.0, %v1426
      %1428 = vmatmul.f32.gmra.mxu0 %v1314
      %v1429 = vpop.f32.mrf.mxu0
      %v1430 = vadd.f32 0.0, %v1429
      %1431 = vmatmul.f32.gmra.mxu0 %v1317
      %v1432 = vpop.f32.mrf.mxu0
      %v1433 = vadd.f32 0.0, %v1432
      %1434 = vmatmul.f32.gmra.mxu0 %v1320
      %v1435 = vpop.f32.mrf.mxu0
      %v1436 = vadd.f32 0.0, %v1435
      %1437 = vmatmul.f32.gmra.mxu0 %v1323
      %v1438 = vpop.f32.mrf.mxu0
      %v1439 = vadd.f32 0.0, %v1438
      %1440 = vmatmul.f32.gmra.mxu0 %v1326
      %v1441 = vpop.f32.mrf.mxu0
      %v1442 = vadd.f32 0.0, %v1441
      %1443 = vmatmul.f32.gmra.mxu0 %v1329
      %v1444 = vpop.f32.mrf.mxu0
      %v1445 = vadd.f32 0.0, %v1444
      %1446 = vmatmul.f32.gmra.mxu0 %v1332
      %v1447 = vpop.f32.mrf.mxu0
      %v1448 = vadd.f32 0.0, %v1447
      %1449 = vmatmul.f32.gmra.mxu0 %v1335
      %v1450 = vpop.f32.mrf.mxu0
      %v1451 = vadd.f32 0.0, %v1450
      %1452 = vmatmul.f32.gmra.mxu0 %v1338
      %v1453 = vpop.f32.mrf.mxu0
      %v1454 = vadd.f32 0.0, %v1453
      %1455 = vmatmul.f32.gmra.mxu0 %v1341
      %v1456 = vpop.f32.mrf.mxu0
      %v1457 = vadd.f32 0.0, %v1456
      %1458 = vmatmul.f32.gmra.mxu0 %v1344
      %v1459 = vpop.f32.mrf.mxu0
      %v1460 = vadd.f32 0.0, %v1459
      %1461 = vmatmul.f32.gmra.mxu0 %v1347
      %v1462 = vpop.f32.mrf.mxu0
      %v1463 = vadd.f32 0.0, %v1462
      %1464 = vmatmul.f32.gmra.mxu0 %v1350
      %v1465 = vpop.f32.mrf.mxu0
      %v1466 = vadd.f32 0.0, %v1465
      %1467 = vmatmul.f32.gmra.mxu0 %v1353
      %v1468 = vpop.f32.mrf.mxu0
      %v1469 = vadd.f32 0.0, %v1468
      %1470 = vmatmul.f32.gmra.mxu0 %v1356
      %v1471 = vpop.f32.mrf.mxu0
      %v1472 = vadd.f32 0.0, %v1471
      %1473 = vmatmul.f32.gmra.mxu0 %v1359
      %v1474 = vpop.f32.mrf.mxu0
      %v1475 = vadd.f32 0.0, %v1474
      %1476 = vmatmul.f32.gmra.mxu0 %v1362
      %v1477 = vpop.f32.mrf.mxu0
      %v1478 = vadd.f32 0.0, %v1477
      %1479 = vmatmul.f32.gmra.mxu0 %v1365
      %v1480 = vpop.f32.mrf.mxu0
      %v1481 = vadd.f32 0.0, %v1480
      %1482 = vmatmul.f32.gmra.mxu0 %v1368
      %v1483 = vpop.f32.mrf.mxu0
      %v1484 = vadd.f32 0.0, %v1483
      %1485 = vmatmul.f32.gmra.mxu0 %v1371
      %v1486 = vpop.f32.mrf.mxu0
      %v1487 = vadd.f32 0.0, %v1486
      %1488 = vmatmul.f32.gmra.mxu0 %v1374
      %v1489 = vpop.f32.mrf.mxu0
      %v1490 = vadd.f32 0.0, %v1489
      %1491 = vmatmul.f32.gmra.mxu0 %v1377
      %v1492 = vpop.f32.mrf.mxu0
      %v1493 = vadd.f32 0.0, %v1492
      %1494 = vdwg.mxu0
      %v1495 = vadd.f32 %v1217, %v1400
      %v1496 = vadd.f32 %v1218, %v1403
      %v1497 = vadd.f32 %v1219, %v1406
      %v1498 = vadd.f32 %v1220, %v1409
      %v1499 = vadd.f32 %v1221, %v1412
      %v1500 = vadd.f32 %v1222, %v1415
      %v1501 = vadd.f32 %v1223, %v1418
      %v1502 = vadd.f32 %v1224, %v1421
      %v1503 = vadd.f32 %v1225, %v1424
      %v1504 = vadd.f32 %v1226, %v1427
      %v1505 = vadd.f32 %v1227, %v1430
      %v1506 = vadd.f32 %v1228, %v1433
      %v1507 = vadd.f32 %v1229, %v1436
      %v1508 = vadd.f32 %v1230, %v1439
      %v1509 = vadd.f32 %v1231, %v1442
      %v1510 = vadd.f32 %v1232, %v1445
      %v1511 = vadd.f32 %v1233, %v1448
      %v1512 = vadd.f32 %v1234, %v1451
      %v1513 = vadd.f32 %v1235, %v1454
      %v1514 = vadd.f32 %v1236, %v1457
      %v1515 = vadd.f32 %v1237, %v1460
      %v1516 = vadd.f32 %v1238, %v1463
      %v1517 = vadd.f32 %v1239, %v1466
      %v1518 = vadd.f32 %v1240, %v1469
      %v1519 = vadd.f32 %v1241, %v1472
      %v1520 = vadd.f32 %v1242, %v1475
      %v1521 = vadd.f32 %v1243, %v1478
      %v1522 = vadd.f32 %v1244, %v1481
      %v1523 = vadd.f32 %v1245, %v1484
      %v1524 = vadd.f32 %v1246, %v1487
      %v1525 = vadd.f32 %v1247, %v1490
      %v1526 = vadd.f32 %v1248, %v1493
      %v1527 = vld [vmem:[%s692 + $0x10] sm:$0xff]
      %v1528 = vld [vmem:[%s692 + $0x18] sm:$0xff]
      %v1529 = vld [vmem:[%s692 + $0x20] sm:$0xff]
      %v1530 = vld [vmem:[%s692 + $0x28] sm:$0xff]
      %v1531 = vld [vmem:[%s692 + $0x30] sm:$0xff]
      %v1532 = vld [vmem:[%s692 + $0x38] sm:$0xff]
      %v1533 = vld [vmem:[%s692 + $0x40] sm:$0xff]
      %v1534 = vld [vmem:[%s692 + $0x48] sm:$0xff]
      %v1535 = vld [vmem:[%s692 + $0x50] sm:$0xff]
      %v1536 = vld [vmem:[%s692 + $0x58] sm:$0xff]
      %v1537 = vld [vmem:[%s692 + $0x60] sm:$0xff]
      %v1538 = vld [vmem:[%s692 + $0x68] sm:$0xff]
      %v1539 = vld [vmem:[%s692 + $0x70] sm:$0xff]
      %v1540 = vld [vmem:[%s692 + $0x78] sm:$0xff]
      %v1541 = vld [vmem:[%s692 + $0x80] sm:$0xff]
      %v1542 = vld [vmem:[%s692 + $0x88] sm:$0xff]
      %v1543 = vld [vmem:[%s692 + $0x90] sm:$0xff]
      %v1544 = vld [vmem:[%s692 + $0x98] sm:$0xff]
      %v1545 = vld [vmem:[%s692 + $0xa0] sm:$0xff]
      %v1546 = vld [vmem:[%s692 + $0xa8] sm:$0xff]
      %v1547 = vld [vmem:[%s692 + $0xb0] sm:$0xff]
      %v1548 = vld [vmem:[%s692 + $0xb8] sm:$0xff]
      %v1549 = vld [vmem:[%s692 + $0xc0] sm:$0xff]
      %v1550 = vld [vmem:[%s692 + $0xc8] sm:$0xff]
      %v1551 = vld [vmem:[%s692 + $0xd0] sm:$0xff]
      %v1552 = vld [vmem:[%s692 + $0xd8] sm:$0xff]
      %v1553 = vld [vmem:[%s692 + $0xe0] sm:$0xff]
      %v1554 = vld [vmem:[%s692 + $0xe8] sm:$0xff]
      %v1555 = vld [vmem:[%s692 + $0xf0] sm:$0xff]
      %v1556 = vld [vmem:[%s692 + $0xf8] sm:$0xff]
      %v1557 = vld [vmem:[%s692 + $0x100] sm:$0xff]
      %v1558 = vld [vmem:[%s692 + $0x108] sm:$0xff]
      %s1559 = scalar_lea.vmem %s1, 20
      %v1560 = vld [vmem:[%s1559] sm:$0xf]
      %v1562 = vsel %vm266, %v1527, 0
      %v1565 = vsel %vm266, %v1528, 0
      %v1568 = vsel %vm266, %v1529, 0
      %v1571 = vsel %vm266, %v1530, 0
      %v1574 = vsel %vm266, %v1531, 0
      %v1577 = vsel %vm266, %v1532, 0
      %v1580 = vsel %vm266, %v1533, 0
      %v1583 = vsel %vm266, %v1534, 0
      %v1586 = vsel %vm266, %v1535, 0
      %v1589 = vsel %vm266, %v1536, 0
      %v1592 = vsel %vm266, %v1537, 0
      %v1595 = vsel %vm266, %v1538, 0
      %v1598 = vsel %vm266, %v1539, 0
      %v1601 = vsel %vm266, %v1540, 0
      %v1604 = vsel %vm266, %v1541, 0
      %v1607 = vsel %vm266, %v1542, 0
      %v1610 = vsel %vm266, %v1543, 0
      %v1613 = vsel %vm266, %v1544, 0
      %v1616 = vsel %vm266, %v1545, 0
      %v1619 = vsel %vm266, %v1546, 0
      %v1622 = vsel %vm266, %v1547, 0
      %v1625 = vsel %vm266, %v1548, 0
      %v1628 = vsel %vm266, %v1549, 0
      %v1631 = vsel %vm266, %v1550, 0
      %v1634 = vsel %vm266, %v1551, 0
      %v1637 = vsel %vm266, %v1552, 0
      %v1640 = vsel %vm266, %v1553, 0
      %v1643 = vsel %vm266, %v1554, 0
      %v1646 = vsel %vm266, %v1555, 0
      %v1649 = vsel %vm266, %v1556, 0
      %v1652 = vsel %vm266, %v1557, 0
      %v1655 = vsel %vm266, %v1558, 0
      %v1658 = vsel %vm363, %v1560, 0
      %1660 = vmatpush.msra.mxu0 0.0
      %1661 = vmatpush.msra.mxu0 0.0
      %1662 = vmatpush.msra.mxu0 0.0
      %1663 = vmatpush.msra.mxu0 0.0
      %1664 = vmatpush.msra.mxu0 0.0
      %1665 = vmatpush.msra.mxu0 0.0
      %1666 = vmatpush.msra.mxu0 0.0
      %1667 = vmatpush.msra.mxu0 0.0
      %1668 = vmatpush.msra.mxu0 0.0
      %1669 = vmatpush.msra.mxu0 0.0
      %1670 = vmatpush.msra.mxu0 0.0
      %1671 = vmatpush.msra.mxu0 0.0
      %1672 = vmatpush.msra.mxu0 0.0
      %1673 = vmatpush.msra.mxu0 0.0
      %1674 = vmatpush.msra.mxu0 0.0
      %1675 = vmatpush.msra.mxu0 %v1658
      %1676 = vmatmul.f32.gmra.mxu0 %v1562
      %v1677 = vpop.f32.mrf.mxu0
      %v1678 = vadd.f32 0.0, %v1677
      %1679 = vmatmul.f32.gmra.mxu0 %v1565
      %v1680 = vpop.f32.mrf.mxu0
      %v1681 = vadd.f32 0.0, %v1680
      %1682 = vmatmul.f32.gmra.mxu0 %v1568
      %v1683 = vpop.f32.mrf.mxu0
      %v1684 = vadd.f32 0.0, %v1683
      %1685 = vmatmul.f32.gmra.mxu0 %v1571
      %v1686 = vpop.f32.mrf.mxu0
      %v1687 = vadd.f32 0.0, %v1686
      %1688 = vmatmul.f32.gmra.mxu0 %v1574
      %v1689 = vpop.f32.mrf.mxu0
      %v1690 = vadd.f32 0.0, %v1689
      %1691 = vmatmul.f32.gmra.mxu0 %v1577
      %v1692 = vpop.f32.mrf.mxu0
      %v1693 = vadd.f32 0.0, %v1692
      %1694 = vmatmul.f32.gmra.mxu0 %v1580
      %v1695 = vpop.f32.mrf.mxu0
      %v1696 = vadd.f32 0.0, %v1695
      %1697 = vmatmul.f32.gmra.mxu0 %v1583
      %v1698 = vpop.f32.mrf.mxu0
      %v1699 = vadd.f32 0.0, %v1698
      %1700 = vmatmul.f32.gmra.mxu0 %v1586
      %v1701 = vpop.f32.mrf.mxu0
      %v1702 = vadd.f32 0.0, %v1701
      %1703 = vmatmul.f32.gmra.mxu0 %v1589
      %v1704 = vpop.f32.mrf.mxu0
      %v1705 = vadd.f32 0.0, %v1704
      %1706 = vmatmul.f32.gmra.mxu0 %v1592
      %v1707 = vpop.f32.mrf.mxu0
      %v1708 = vadd.f32 0.0, %v1707
      %1709 = vmatmul.f32.gmra.mxu0 %v1595
      %v1710 = vpop.f32.mrf.mxu0
      %v1711 = vadd.f32 0.0, %v1710
      %1712 = vmatmul.f32.gmra.mxu0 %v1598
      %v1713 = vpop.f32.mrf.mxu0
      %v1714 = vadd.f32 0.0, %v1713
      %1715 = vmatmul.f32.gmra.mxu0 %v1601
      %v1716 = vpop.f32.mrf.mxu0
      %v1717 = vadd.f32 0.0, %v1716
      %1718 = vmatmul.f32.gmra.mxu0 %v1604
      %v1719 = vpop.f32.mrf.mxu0
      %v1720 = vadd.f32 0.0, %v1719
      %1721 = vmatmul.f32.gmra.mxu0 %v1607
      %v1722 = vpop.f32.mrf.mxu0
      %v1723 = vadd.f32 0.0, %v1722
      %1724 = vmatmul.f32.gmra.mxu0 %v1610
      %v1725 = vpop.f32.mrf.mxu0
      %v1726 = vadd.f32 0.0, %v1725
      %1727 = vmatmul.f32.gmra.mxu0 %v1613
      %v1728 = vpop.f32.mrf.mxu0
      %v1729 = vadd.f32 0.0, %v1728
      %1730 = vmatmul.f32.gmra.mxu0 %v1616
      %v1731 = vpop.f32.mrf.mxu0
      %v1732 = vadd.f32 0.0, %v1731
      %1733 = vmatmul.f32.gmra.mxu0 %v1619
      %v1734 = vpop.f32.mrf.mxu0
      %v1735 = vadd.f32 0.0, %v1734
      %1736 = vmatmul.f32.gmra.mxu0 %v1622
      %v1737 = vpop.f32.mrf.mxu0
      %v1738 = vadd.f32 0.0, %v1737
      %1739 = vmatmul.f32.gmra.mxu0 %v1625
      %v1740 = vpop.f32.mrf.mxu0
      %v1741 = vadd.f32 0.0, %v1740
      %1742 = vmatmul.f32.gmra.mxu0 %v1628
      %v1743 = vpop.f32.mrf.mxu0
      %v1744 = vadd.f32 0.0, %v1743
      %1745 = vmatmul.f32.gmra.mxu0 %v1631
      %v1746 = vpop.f32.mrf.mxu0
      %v1747 = vadd.f32 0.0, %v1746
      %1748 = vmatmul.f32.gmra.mxu0 %v1634
      %v1749 = vpop.f32.mrf.mxu0
      %v1750 = vadd.f32 0.0, %v1749
      %1751 = vmatmul.f32.gmra.mxu0 %v1637
      %v1752 = vpop.f32.mrf.mxu0
      %v1753 = vadd.f32 0.0, %v1752
      %1754 = vmatmul.f32.gmra.mxu0 %v1640
      %v1755 = vpop.f32.mrf.mxu0
      %v1756 = vadd.f32 0.0, %v1755
      %1757 = vmatmul.f32.gmra.mxu0 %v1643
      %v1758 = vpop.f32.mrf.mxu0
      %v1759 = vadd.f32 0.0, %v1758
      %1760 = vmatmul.f32.gmra.mxu0 %v1646
      %v1761 = vpop.f32.mrf.mxu0
      %v1762 = vadd.f32 0.0, %v1761
      %1763 = vmatmul.f32.gmra.mxu0 %v1649
      %v1764 = vpop.f32.mrf.mxu0
      %v1765 = vadd.f32 0.0, %v1764
      %1766 = vmatmul.f32.gmra.mxu0 %v1652
      %v1767 = vpop.f32.mrf.mxu0
      %v1768 = vadd.f32 0.0, %v1767
      %1769 = vmatmul.f32.gmra.mxu0 %v1655
      %v1770 = vpop.f32.mrf.mxu0
      %v1771 = vadd.f32 0.0, %v1770
      %1772 = vdwg.mxu0
      %v1773 = vadd.f32 %v1495, %v1678
      %v1774 = vadd.f32 %v1496, %v1681
      %v1775 = vadd.f32 %v1497, %v1684
      %v1776 = vadd.f32 %v1498, %v1687
      %v1777 = vadd.f32 %v1499, %v1690
      %v1778 = vadd.f32 %v1500, %v1693
      %v1779 = vadd.f32 %v1501, %v1696
      %v1780 = vadd.f32 %v1502, %v1699
      %v1781 = vadd.f32 %v1503, %v1702
      %v1782 = vadd.f32 %v1504, %v1705
      %v1783 = vadd.f32 %v1505, %v1708
      %v1784 = vadd.f32 %v1506, %v1711
      %v1785 = vadd.f32 %v1507, %v1714
      %v1786 = vadd.f32 %v1508, %v1717
      %v1787 = vadd.f32 %v1509, %v1720
      %v1788 = vadd.f32 %v1510, %v1723
      %v1789 = vadd.f32 %v1511, %v1726
      %v1790 = vadd.f32 %v1512, %v1729
      %v1791 = vadd.f32 %v1513, %v1732
      %v1792 = vadd.f32 %v1514, %v1735
      %v1793 = vadd.f32 %v1515, %v1738
      %v1794 = vadd.f32 %v1516, %v1741
      %v1795 = vadd.f32 %v1517, %v1744
      %v1796 = vadd.f32 %v1518, %v1747
      %v1797 = vadd.f32 %v1519, %v1750
      %v1798 = vadd.f32 %v1520, %v1753
      %v1799 = vadd.f32 %v1521, %v1756
      %v1800 = vadd.f32 %v1522, %v1759
      %v1801 = vadd.f32 %v1523, %v1762
      %v1802 = vadd.f32 %v1524, %v1765
      %v1803 = vadd.f32 %v1525, %v1768
      %v1804 = vadd.f32 %v1526, %v1771
      %v1805 = vld [vmem:[%s192 + $0x20] sm:$0xff]
      %v1806 = vld [vmem:[%s192 + $0x28] sm:$0xff]
      %v1807 = vld [vmem:[%s192 + $0x30] sm:$0xff]
      %v1808 = vld [vmem:[%s192 + $0x38] sm:$0xff]
      %v1809 = vld [vmem:[%s192 + $0x40] sm:$0xff]
      %v1810 = vld [vmem:[%s192 + $0x48] sm:$0xff]
      %v1811 = vld [vmem:[%s192 + $0x50] sm:$0xff]
      %v1812 = vld [vmem:[%s192 + $0x58] sm:$0xff]
      %v1813 = vld [vmem:[%s192 + $0x60] sm:$0xff]
      %v1814 = vld [vmem:[%s192 + $0x68] sm:$0xff]
      %v1815 = vld [vmem:[%s192 + $0x70] sm:$0xff]
      %v1816 = vld [vmem:[%s192 + $0x78] sm:$0xff]
      %v1817 = vld [vmem:[%s192 + $0x80] sm:$0xff]
      %v1818 = vld [vmem:[%s192 + $0x88] sm:$0xff]
      %v1819 = vld [vmem:[%s192 + $0x90] sm:$0xff]
      %v1820 = vld [vmem:[%s192 + $0x98] sm:$0xff]
      %v1821 = vld [vmem:[%s192 + $0xa0] sm:$0xff]
      %v1822 = vld [vmem:[%s192 + $0xa8] sm:$0xff]
      %v1823 = vld [vmem:[%s192 + $0xb0] sm:$0xff]
      %v1824 = vld [vmem:[%s192 + $0xb8] sm:$0xff]
      %v1825 = vld [vmem:[%s192 + $0xc0] sm:$0xff]
      %v1826 = vld [vmem:[%s192 + $0xc8] sm:$0xff]
      %v1827 = vld [vmem:[%s192 + $0xd0] sm:$0xff]
      %v1828 = vld [vmem:[%s192 + $0xd8] sm:$0xff]
      %v1829 = vld [vmem:[%s192 + $0xe0] sm:$0xff]
      %v1830 = vld [vmem:[%s192 + $0xe8] sm:$0xff]
      %v1831 = vld [vmem:[%s192 + $0xf0] sm:$0xff]
      %v1832 = vld [vmem:[%s192 + $0xf8] sm:$0xff]
      %v1833 = vld [vmem:[%s192 + $0x100] sm:$0xff]
      %v1834 = vld [vmem:[%s192 + $0x108] sm:$0xff]
      %v1835 = vld [vmem:[%s192 + $0x110] sm:$0xff]
      %v1836 = vld [vmem:[%s192 + $0x118] sm:$0xff]
      %s1837 = scalar_lea.vmem %s1, 24
      %v1838 = vld [vmem:[%s1837] sm:$0xf]
      %v1840 = vsel %vm266, %v1805, 0
      %v1843 = vsel %vm266, %v1806, 0
      %v1846 = vsel %vm266, %v1807, 0
      %v1849 = vsel %vm266, %v1808, 0
      %v1852 = vsel %vm266, %v1809, 0
      %v1855 = vsel %vm266, %v1810, 0
      %v1858 = vsel %vm266, %v1811, 0
      %v1861 = vsel %vm266, %v1812, 0
      %v1864 = vsel %vm266, %v1813, 0
      %v1867 = vsel %vm266, %v1814, 0
      %v1870 = vsel %vm266, %v1815, 0
      %v1873 = vsel %vm266, %v1816, 0
      %v1876 = vsel %vm266, %v1817, 0
      %v1879 = vsel %vm266, %v1818, 0
      %v1882 = vsel %vm266, %v1819, 0
      %v1885 = vsel %vm266, %v1820, 0
      %v1888 = vsel %vm266, %v1821, 0
      %v1891 = vsel %vm266, %v1822, 0
      %v1894 = vsel %vm266, %v1823, 0
      %v1897 = vsel %vm266, %v1824, 0
      %v1900 = vsel %vm266, %v1825, 0
      %v1903 = vsel %vm266, %v1826, 0
      %v1906 = vsel %vm266, %v1827, 0
      %v1909 = vsel %vm266, %v1828, 0
      %v1912 = vsel %vm266, %v1829, 0
      %v1915 = vsel %vm266, %v1830, 0
      %v1918 = vsel %vm266, %v1831, 0
      %v1921 = vsel %vm266, %v1832, 0
      %v1924 = vsel %vm266, %v1833, 0
      %v1927 = vsel %vm266, %v1834, 0
      %v1930 = vsel %vm266, %v1835, 0
      %v1933 = vsel %vm266, %v1836, 0
      %v1936 = vsel %vm363, %v1838, 0
      %1938 = vmatpush.msra.mxu0 0.0
      %1939 = vmatpush.msra.mxu0 0.0
      %1940 = vmatpush.msra.mxu0 0.0
      %1941 = vmatpush.msra.mxu0 0.0
      %1942 = vmatpush.msra.mxu0 0.0
      %1943 = vmatpush.msra.mxu0 0.0
      %1944 = vmatpush.msra.mxu0 0.0
      %1945 = vmatpush.msra.mxu0 0.0
      %1946 = vmatpush.msra.mxu0 0.0
      %1947 = vmatpush.msra.mxu0 0.0
      %1948 = vmatpush.msra.mxu0 0.0
      %1949 = vmatpush.msra.mxu0 0.0
      %1950 = vmatpush.msra.mxu0 0.0
      %1951 = vmatpush.msra.mxu0 0.0
      %1952 = vmatpush.msra.mxu0 0.0
      %1953 = vmatpush.msra.mxu0 %v1936
      %1954 = vmatmul.f32.gmra.mxu0 %v1840
      %v1955 = vpop.f32.mrf.mxu0
      %v1956 = vadd.f32 0.0, %v1955
      %1957 = vmatmul.f32.gmra.mxu0 %v1843
      %v1958 = vpop.f32.mrf.mxu0
      %v1959 = vadd.f32 0.0, %v1958
      %1960 = vmatmul.f32.gmra.mxu0 %v1846
      %v1961 = vpop.f32.mrf.mxu0
      %v1962 = vadd.f32 0.0, %v1961
      %1963 = vmatmul.f32.gmra.mxu0 %v1849
      %v1964 = vpop.f32.mrf.mxu0
      %v1965 = vadd.f32 0.0, %v1964
      %1966 = vmatmul.f32.gmra.mxu0 %v1852
      %v1967 = vpop.f32.mrf.mxu0
      %v1968 = vadd.f32 0.0, %v1967
      %1969 = vmatmul.f32.gmra.mxu0 %v1855
      %v1970 = vpop.f32.mrf.mxu0
      %v1971 = vadd.f32 0.0, %v1970
      %1972 = vmatmul.f32.gmra.mxu0 %v1858
      %v1973 = vpop.f32.mrf.mxu0
      %v1974 = vadd.f32 0.0, %v1973
      %1975 = vmatmul.f32.gmra.mxu0 %v1861
      %v1976 = vpop.f32.mrf.mxu0
      %v1977 = vadd.f32 0.0, %v1976
      %1978 = vmatmul.f32.gmra.mxu0 %v1864
      %v1979 = vpop.f32.mrf.mxu0
      %v1980 = vadd.f32 0.0, %v1979
      %1981 = vmatmul.f32.gmra.mxu0 %v1867
      %v1982 = vpop.f32.mrf.mxu0
      %v1983 = vadd.f32 0.0, %v1982
      %1984 = vmatmul.f32.gmra.mxu0 %v1870
      %v1985 = vpop.f32.mrf.mxu0
      %v1986 = vadd.f32 0.0, %v1985
      %1987 = vmatmul.f32.gmra.mxu0 %v1873
      %v1988 = vpop.f32.mrf.mxu0
      %v1989 = vadd.f32 0.0, %v1988
      %1990 = vmatmul.f32.gmra.mxu0 %v1876
      %v1991 = vpop.f32.mrf.mxu0
      %v1992 = vadd.f32 0.0, %v1991
      %1993 = vmatmul.f32.gmra.mxu0 %v1879
      %v1994 = vpop.f32.mrf.mxu0
      %v1995 = vadd.f32 0.0, %v1994
      %1996 = vmatmul.f32.gmra.mxu0 %v1882
      %v1997 = vpop.f32.mrf.mxu0
      %v1998 = vadd.f32 0.0, %v1997
      %1999 = vmatmul.f32.gmra.mxu0 %v1885
      %v2000 = vpop.f32.mrf.mxu0
      %v2001 = vadd.f32 0.0, %v2000
      %2002 = vmatmul.f32.gmra.mxu0 %v1888
      %v2003 = vpop.f32.mrf.mxu0
      %v2004 = vadd.f32 0.0, %v2003
      %2005 = vmatmul.f32.gmra.mxu0 %v1891
      %v2006 = vpop.f32.mrf.mxu0
      %v2007 = vadd.f32 0.0, %v2006
      %2008 = vmatmul.f32.gmra.mxu0 %v1894
      %v2009 = vpop.f32.mrf.mxu0
      %v2010 = vadd.f32 0.0, %v2009
      %2011 = vmatmul.f32.gmra.mxu0 %v1897
      %v2012 = vpop.f32.mrf.mxu0
      %v2013 = vadd.f32 0.0, %v2012
      %2014 = vmatmul.f32.gmra.mxu0 %v1900
      %v2015 = vpop.f32.mrf.mxu0
      %v2016 = vadd.f32 0.0, %v2015
      %2017 = vmatmul.f32.gmra.mxu0 %v1903
      %v2018 = vpop.f32.mrf.mxu0
      %v2019 = vadd.f32 0.0, %v2018
      %2020 = vmatmul.f32.gmra.mxu0 %v1906
      %v2021 = vpop.f32.mrf.mxu0
      %v2022 = vadd.f32 0.0, %v2021
      %2023 = vmatmul.f32.gmra.mxu0 %v1909
      %v2024 = vpop.f32.mrf.mxu0
      %v2025 = vadd.f32 0.0, %v2024
      %2026 = vmatmul.f32.gmra.mxu0 %v1912
      %v2027 = vpop.f32.mrf.mxu0
      %v2028 = vadd.f32 0.0, %v2027
      %2029 = vmatmul.f32.gmra.mxu0 %v1915
      %v2030 = vpop.f32.mrf.mxu0
      %v2031 = vadd.f32 0.0, %v2030
      %2032 = vmatmul.f32.gmra.mxu0 %v1918
      %v2033 = vpop.f32.mrf.mxu0
      %v2034 = vadd.f32 0.0, %v2033
      %2035 = vmatmul.f32.gmra.mxu0 %v1921
      %v2036 = vpop.f32.mrf.mxu0
      %v2037 = vadd.f32 0.0, %v2036
      %2038 = vmatmul.f32.gmra.mxu0 %v1924
      %v2039 = vpop.f32.mrf.mxu0
      %v2040 = vadd.f32 0.0, %v2039
      %2041 = vmatmul.f32.gmra.mxu0 %v1927
      %v2042 = vpop.f32.mrf.mxu0
      %v2043 = vadd.f32 0.0, %v2042
      %2044 = vmatmul.f32.gmra.mxu0 %v1930
      %v2045 = vpop.f32.mrf.mxu0
      %v2046 = vadd.f32 0.0, %v2045
      %2047 = vmatmul.f32.gmra.mxu0 %v1933
      %v2048 = vpop.f32.mrf.mxu0
      %v2049 = vadd.f32 0.0, %v2048
      %2050 = vdwg.mxu0
      %v2051 = vadd.f32 %v1773, %v1956
      %v2052 = vadd.f32 %v1774, %v1959
      %v2053 = vadd.f32 %v1775, %v1962
      %v2054 = vadd.f32 %v1776, %v1965
      %v2055 = vadd.f32 %v1777, %v1968
      %v2056 = vadd.f32 %v1778, %v1971
      %v2057 = vadd.f32 %v1779, %v1974
      %v2058 = vadd.f32 %v1780, %v1977
      %v2059 = vadd.f32 %v1781, %v1980
      %v2060 = vadd.f32 %v1782, %v1983
      %v2061 = vadd.f32 %v1783, %v1986
      %v2062 = vadd.f32 %v1784, %v1989
      %v2063 = vadd.f32 %v1785, %v1992
      %v2064 = vadd.f32 %v1786, %v1995
      %v2065 = vadd.f32 %v1787, %v1998
      %v2066 = vadd.f32 %v1788, %v2001
      %v2067 = vadd.f32 %v1789, %v2004
      %v2068 = vadd.f32 %v1790, %v2007
      %v2069 = vadd.f32 %v1791, %v2010
      %v2070 = vadd.f32 %v1792, %v2013
      %v2071 = vadd.f32 %v1793, %v2016
      %v2072 = vadd.f32 %v1794, %v2019
      %v2073 = vadd.f32 %v1795, %v2022
      %v2074 = vadd.f32 %v1796, %v2025
      %v2075 = vadd.f32 %v1797, %v2028
      %v2076 = vadd.f32 %v1798, %v2031
      %v2077 = vadd.f32 %v1799, %v2034
      %v2078 = vadd.f32 %v1800, %v2037
      %v2079 = vadd.f32 %v1801, %v2040
      %v2080 = vadd.f32 %v1802, %v2043
      %v2081 = vadd.f32 %v1803, %v2046
      %v2082 = vadd.f32 %v1804, %v2049
      %v2083 = vld [vmem:[%s231 + $0x20] sm:$0xff]
      %v2084 = vld [vmem:[%s231 + $0x28] sm:$0xff]
      %v2085 = vld [vmem:[%s231 + $0x30] sm:$0xff]
      %v2086 = vld [vmem:[%s231 + $0x38] sm:$0xff]
      %v2087 = vld [vmem:[%s231 + $0x40] sm:$0xff]
      %v2088 = vld [vmem:[%s231 + $0x48] sm:$0xff]
      %v2089 = vld [vmem:[%s231 + $0x50] sm:$0xff]
      %v2090 = vld [vmem:[%s231 + $0x58] sm:$0xff]
      %v2091 = vld [vmem:[%s231 + $0x60] sm:$0xff]
      %v2092 = vld [vmem:[%s231 + $0x68] sm:$0xff]
      %v2093 = vld [vmem:[%s231 + $0x70] sm:$0xff]
      %v2094 = vld [vmem:[%s231 + $0x78] sm:$0xff]
      %v2095 = vld [vmem:[%s231 + $0x80] sm:$0xff]
      %v2096 = vld [vmem:[%s231 + $0x88] sm:$0xff]
      %v2097 = vld [vmem:[%s231 + $0x90] sm:$0xff]
      %v2098 = vld [vmem:[%s231 + $0x98] sm:$0xff]
      %v2099 = vld [vmem:[%s231 + $0xa0] sm:$0xff]
      %v2100 = vld [vmem:[%s231 + $0xa8] sm:$0xff]
      %v2101 = vld [vmem:[%s231 + $0xb0] sm:$0xff]
      %v2102 = vld [vmem:[%s231 + $0xb8] sm:$0xff]
      %v2103 = vld [vmem:[%s231 + $0xc0] sm:$0xff]
      %v2104 = vld [vmem:[%s231 + $0xc8] sm:$0xff]
      %v2105 = vld [vmem:[%s231 + $0xd0] sm:$0xff]
      %v2106 = vld [vmem:[%s231 + $0xd8] sm:$0xff]
      %v2107 = vld [vmem:[%s231 + $0xe0] sm:$0xff]
      %v2108 = vld [vmem:[%s231 + $0xe8] sm:$0xff]
      %v2109 = vld [vmem:[%s231 + $0xf0] sm:$0xff]
      %v2110 = vld [vmem:[%s231 + $0xf8] sm:$0xff]
      %v2111 = vld [vmem:[%s231 + $0x100] sm:$0xff]
      %v2112 = vld [vmem:[%s231 + $0x108] sm:$0xff]
      %v2113 = vld [vmem:[%s231 + $0x110] sm:$0xff]
      %v2114 = vld [vmem:[%s231 + $0x118] sm:$0xff]
      %s2115 = scalar_lea.vmem %s1, 28
      %v2116 = vld [vmem:[%s2115] sm:$0xf]
      %v2118 = vsel %vm266, %v2083, 0
      %v2121 = vsel %vm266, %v2084, 0
      %v2124 = vsel %vm266, %v2085, 0
      %v2127 = vsel %vm266, %v2086, 0
      %v2130 = vsel %vm266, %v2087, 0
      %v2133 = vsel %vm266, %v2088, 0
      %v2136 = vsel %vm266, %v2089, 0
      %v2139 = vsel %vm266, %v2090, 0
      %v2142 = vsel %vm266, %v2091, 0
      %v2145 = vsel %vm266, %v2092, 0
      %v2148 = vsel %vm266, %v2093, 0
      %v2151 = vsel %vm266, %v2094, 0
      %v2154 = vsel %vm266, %v2095, 0
      %v2157 = vsel %vm266, %v2096, 0
      %v2160 = vsel %vm266, %v2097, 0
      %v2163 = vsel %vm266, %v2098, 0
      %v2166 = vsel %vm266, %v2099, 0
      %v2169 = vsel %vm266, %v2100, 0
      %v2172 = vsel %vm266, %v2101, 0
      %v2175 = vsel %vm266, %v2102, 0
      %v2178 = vsel %vm266, %v2103, 0
      %v2181 = vsel %vm266, %v2104, 0
      %v2184 = vsel %vm266, %v2105, 0
      %v2187 = vsel %vm266, %v2106, 0
      %v2190 = vsel %vm266, %v2107, 0
      %v2193 = vsel %vm266, %v2108, 0
      %v2196 = vsel %vm266, %v2109, 0
      %v2199 = vsel %vm266, %v2110, 0
      %v2202 = vsel %vm266, %v2111, 0
      %v2205 = vsel %vm266, %v2112, 0
      %v2208 = vsel %vm266, %v2113, 0
      %v2211 = vsel %vm266, %v2114, 0
      %v2214 = vsel %vm363, %v2116, 0
      %2216 = vmatpush.msra.mxu0 0.0
      %2217 = vmatpush.msra.mxu0 0.0
      %2218 = vmatpush.msra.mxu0 0.0
      %2219 = vmatpush.msra.mxu0 0.0
      %2220 = vmatpush.msra.mxu0 0.0
      %2221 = vmatpush.msra.mxu0 0.0
      %2222 = vmatpush.msra.mxu0 0.0
      %2223 = vmatpush.msra.mxu0 0.0
      %2224 = vmatpush.msra.mxu0 0.0
      %2225 = vmatpush.msra.mxu0 0.0
      %2226 = vmatpush.msra.mxu0 0.0
      %2227 = vmatpush.msra.mxu0 0.0
      %2228 = vmatpush.msra.mxu0 0.0
      %2229 = vmatpush.msra.mxu0 0.0
      %2230 = vmatpush.msra.mxu0 0.0
      %2231 = vmatpush.msra.mxu0 %v2214
      %2232 = vmatmul.f32.gmra.mxu0 %v2118
      %v2233 = vpop.f32.mrf.mxu0
      %v2234 = vadd.f32 0.0, %v2233
      %2235 = vmatmul.f32.gmra.mxu0 %v2121
      %v2236 = vpop.f32.mrf.mxu0
      %v2237 = vadd.f32 0.0, %v2236
      %2238 = vmatmul.f32.gmra.mxu0 %v2124
      %v2239 = vpop.f32.mrf.mxu0
      %v2240 = vadd.f32 0.0, %v2239
      %2241 = vmatmul.f32.gmra.mxu0 %v2127
      %v2242 = vpop.f32.mrf.mxu0
      %v2243 = vadd.f32 0.0, %v2242
      %2244 = vmatmul.f32.gmra.mxu0 %v2130
      %v2245 = vpop.f32.mrf.mxu0
      %v2246 = vadd.f32 0.0, %v2245
      %2247 = vmatmul.f32.gmra.mxu0 %v2133
      %v2248 = vpop.f32.mrf.mxu0
      %v2249 = vadd.f32 0.0, %v2248
      %2250 = vmatmul.f32.gmra.mxu0 %v2136
      %v2251 = vpop.f32.mrf.mxu0
      %v2252 = vadd.f32 0.0, %v2251
      %2253 = vmatmul.f32.gmra.mxu0 %v2139
      %v2254 = vpop.f32.mrf.mxu0
      %v2255 = vadd.f32 0.0, %v2254
      %2256 = vmatmul.f32.gmra.mxu0 %v2142
      %v2257 = vpop.f32.mrf.mxu0
      %v2258 = vadd.f32 0.0, %v2257
      %2259 = vmatmul.f32.gmra.mxu0 %v2145
      %v2260 = vpop.f32.mrf.mxu0
      %v2261 = vadd.f32 0.0, %v2260
      %2262 = vmatmul.f32.gmra.mxu0 %v2148
      %v2263 = vpop.f32.mrf.mxu0
      %v2264 = vadd.f32 0.0, %v2263
      %2265 = vmatmul.f32.gmra.mxu0 %v2151
      %v2266 = vpop.f32.mrf.mxu0
      %v2267 = vadd.f32 0.0, %v2266
      %2268 = vmatmul.f32.gmra.mxu0 %v2154
      %v2269 = vpop.f32.mrf.mxu0
      %v2270 = vadd.f32 0.0, %v2269
      %2271 = vmatmul.f32.gmra.mxu0 %v2157
      %v2272 = vpop.f32.mrf.mxu0
      %v2273 = vadd.f32 0.0, %v2272
      %2274 = vmatmul.f32.gmra.mxu0 %v2160
      %v2275 = vpop.f32.mrf.mxu0
      %v2276 = vadd.f32 0.0, %v2275
      %2277 = vmatmul.f32.gmra.mxu0 %v2163
      %v2278 = vpop.f32.mrf.mxu0
      %v2279 = vadd.f32 0.0, %v2278
      %2280 = vmatmul.f32.gmra.mxu0 %v2166
      %v2281 = vpop.f32.mrf.mxu0
      %v2282 = vadd.f32 0.0, %v2281
      %2283 = vmatmul.f32.gmra.mxu0 %v2169
      %v2284 = vpop.f32.mrf.mxu0
      %v2285 = vadd.f32 0.0, %v2284
      %2286 = vmatmul.f32.gmra.mxu0 %v2172
      %v2287 = vpop.f32.mrf.mxu0
      %v2288 = vadd.f32 0.0, %v2287
      %2289 = vmatmul.f32.gmra.mxu0 %v2175
      %v2290 = vpop.f32.mrf.mxu0
      %v2291 = vadd.f32 0.0, %v2290
      %2292 = vmatmul.f32.gmra.mxu0 %v2178
      %v2293 = vpop.f32.mrf.mxu0
      %v2294 = vadd.f32 0.0, %v2293
      %2295 = vmatmul.f32.gmra.mxu0 %v2181
      %v2296 = vpop.f32.mrf.mxu0
      %v2297 = vadd.f32 0.0, %v2296
      %2298 = vmatmul.f32.gmra.mxu0 %v2184
      %v2299 = vpop.f32.mrf.mxu0
      %v2300 = vadd.f32 0.0, %v2299
      %2301 = vmatmul.f32.gmra.mxu0 %v2187
      %v2302 = vpop.f32.mrf.mxu0
      %v2303 = vadd.f32 0.0, %v2302
      %2304 = vmatmul.f32.gmra.mxu0 %v2190
      %v2305 = vpop.f32.mrf.mxu0
      %v2306 = vadd.f32 0.0, %v2305
      %2307 = vmatmul.f32.gmra.mxu0 %v2193
      %v2308 = vpop.f32.mrf.mxu0
      %v2309 = vadd.f32 0.0, %v2308
      %2310 = vmatmul.f32.gmra.mxu0 %v2196
      %v2311 = vpop.f32.mrf.mxu0
      %v2312 = vadd.f32 0.0, %v2311
      %2313 = vmatmul.f32.gmra.mxu0 %v2199
      %v2314 = vpop.f32.mrf.mxu0
      %v2315 = vadd.f32 0.0, %v2314
      %2316 = vmatmul.f32.gmra.mxu0 %v2202
      %v2317 = vpop.f32.mrf.mxu0
      %v2318 = vadd.f32 0.0, %v2317
      %2319 = vmatmul.f32.gmra.mxu0 %v2205
      %v2320 = vpop.f32.mrf.mxu0
      %v2321 = vadd.f32 0.0, %v2320
      %2322 = vmatmul.f32.gmra.mxu0 %v2208
      %v2323 = vpop.f32.mrf.mxu0
      %v2324 = vadd.f32 0.0, %v2323
      %2325 = vmatmul.f32.gmra.mxu0 %v2211
      %v2326 = vpop.f32.mrf.mxu0
      %v2327 = vadd.f32 0.0, %v2326
      %2328 = vdwg.mxu0
      %v2329 = vadd.f32 %v2051, %v2234
      %v2330 = vadd.f32 %v2052, %v2237
      %v2331 = vadd.f32 %v2053, %v2240
      %v2332 = vadd.f32 %v2054, %v2243
      %v2333 = vadd.f32 %v2055, %v2246
      %v2334 = vadd.f32 %v2056, %v2249
      %v2335 = vadd.f32 %v2057, %v2252
      %v2336 = vadd.f32 %v2058, %v2255
      %v2337 = vadd.f32 %v2059, %v2258
      %v2338 = vadd.f32 %v2060, %v2261
      %v2339 = vadd.f32 %v2061, %v2264
      %v2340 = vadd.f32 %v2062, %v2267
      %v2341 = vadd.f32 %v2063, %v2270
      %v2342 = vadd.f32 %v2064, %v2273
      %v2343 = vadd.f32 %v2065, %v2276
      %v2344 = vadd.f32 %v2066, %v2279
      %v2345 = vadd.f32 %v2067, %v2282
      %v2346 = vadd.f32 %v2068, %v2285
      %v2347 = vadd.f32 %v2069, %v2288
      %v2348 = vadd.f32 %v2070, %v2291
      %v2349 = vadd.f32 %v2071, %v2294
      %v2350 = vadd.f32 %v2072, %v2297
      %v2351 = vadd.f32 %v2073, %v2300
      %v2352 = vadd.f32 %v2074, %v2303
      %v2353 = vadd.f32 %v2075, %v2306
      %v2354 = vadd.f32 %v2076, %v2309
      %v2355 = vadd.f32 %v2077, %v2312
      %v2356 = vadd.f32 %v2078, %v2315
      %v2357 = vadd.f32 %v2079, %v2318
      %v2358 = vadd.f32 %v2080, %v2321
      %v2359 = vadd.f32 %v2081, %v2324
      %v2360 = vadd.f32 %v2082, %v2327
      %v2361 = vld [vmem:[%s692 + $0x20] sm:$0xff]
      %v2362 = vld [vmem:[%s692 + $0x28] sm:$0xff]
      %v2363 = vld [vmem:[%s692 + $0x30] sm:$0xff]
      %v2364 = vld [vmem:[%s692 + $0x38] sm:$0xff]
      %v2365 = vld [vmem:[%s692 + $0x40] sm:$0xff]
      %v2366 = vld [vmem:[%s692 + $0x48] sm:$0xff]
      %v2367 = vld [vmem:[%s692 + $0x50] sm:$0xff]
      %v2368 = vld [vmem:[%s692 + $0x58] sm:$0xff]
      %v2369 = vld [vmem:[%s692 + $0x60] sm:$0xff]
      %v2370 = vld [vmem:[%s692 + $0x68] sm:$0xff]
      %v2371 = vld [vmem:[%s692 + $0x70] sm:$0xff]
      %v2372 = vld [vmem:[%s692 + $0x78] sm:$0xff]
      %v2373 = vld [vmem:[%s692 + $0x80] sm:$0xff]
      %v2374 = vld [vmem:[%s692 + $0x88] sm:$0xff]
      %v2375 = vld [vmem:[%s692 + $0x90] sm:$0xff]
      %v2376 = vld [vmem:[%s692 + $0x98] sm:$0xff]
      %v2377 = vld [vmem:[%s692 + $0xa0] sm:$0xff]
      %v2378 = vld [vmem:[%s692 + $0xa8] sm:$0xff]
      %v2379 = vld [vmem:[%s692 + $0xb0] sm:$0xff]
      %v2380 = vld [vmem:[%s692 + $0xb8] sm:$0xff]
      %v2381 = vld [vmem:[%s692 + $0xc0] sm:$0xff]
      %v2382 = vld [vmem:[%s692 + $0xc8] sm:$0xff]
      %v2383 = vld [vmem:[%s692 + $0xd0] sm:$0xff]
      %v2384 = vld [vmem:[%s692 + $0xd8] sm:$0xff]
      %v2385 = vld [vmem:[%s692 + $0xe0] sm:$0xff]
      %v2386 = vld [vmem:[%s692 + $0xe8] sm:$0xff]
      %v2387 = vld [vmem:[%s692 + $0xf0] sm:$0xff]
      %v2388 = vld [vmem:[%s692 + $0xf8] sm:$0xff]
      %v2389 = vld [vmem:[%s692 + $0x100] sm:$0xff]
      %v2390 = vld [vmem:[%s692 + $0x108] sm:$0xff]
      %v2391 = vld [vmem:[%s692 + $0x110] sm:$0xff]
      %v2392 = vld [vmem:[%s692 + $0x118] sm:$0xff]
      %s2393 = scalar_lea.vmem %s1, 32
      %v2394 = vld [vmem:[%s2393] sm:$0xf]
      %v2396 = vsel %vm266, %v2361, 0
      %v2399 = vsel %vm266, %v2362, 0
      %v2402 = vsel %vm266, %v2363, 0
      %v2405 = vsel %vm266, %v2364, 0
      %v2408 = vsel %vm266, %v2365, 0
      %v2411 = vsel %vm266, %v2366, 0
      %v2414 = vsel %vm266, %v2367, 0
      %v2417 = vsel %vm266, %v2368, 0
      %v2420 = vsel %vm266, %v2369, 0
      %v2423 = vsel %vm266, %v2370, 0
      %v2426 = vsel %vm266, %v2371, 0
      %v2429 = vsel %vm266, %v2372, 0
      %v2432 = vsel %vm266, %v2373, 0
      %v2435 = vsel %vm266, %v2374, 0
      %v2438 = vsel %vm266, %v2375, 0
      %v2441 = vsel %vm266, %v2376, 0
      %v2444 = vsel %vm266, %v2377, 0
      %v2447 = vsel %vm266, %v2378, 0
      %v2450 = vsel %vm266, %v2379, 0
      %v2453 = vsel %vm266, %v2380, 0
      %v2456 = vsel %vm266, %v2381, 0
      %v2459 = vsel %vm266, %v2382, 0
      %v2462 = vsel %vm266, %v2383, 0
      %v2465 = vsel %vm266, %v2384, 0
      %v2468 = vsel %vm266, %v2385, 0
      %v2471 = vsel %vm266, %v2386, 0
      %v2474 = vsel %vm266, %v2387, 0
      %v2477 = vsel %vm266, %v2388, 0
      %v2480 = vsel %vm266, %v2389, 0
      %v2483 = vsel %vm266, %v2390, 0
      %v2486 = vsel %vm266, %v2391, 0
      %v2489 = vsel %vm266, %v2392, 0
      %v2492 = vsel %vm363, %v2394, 0
      %2494 = vmatpush.msra.mxu0 0.0
      %2495 = vmatpush.msra.mxu0 0.0
      %2496 = vmatpush.msra.mxu0 0.0
      %2497 = vmatpush.msra.mxu0 0.0
      %2498 = vmatpush.msra.mxu0 0.0
      %2499 = vmatpush.msra.mxu0 0.0
      %2500 = vmatpush.msra.mxu0 0.0
      %2501 = vmatpush.msra.mxu0 0.0
      %2502 = vmatpush.msra.mxu0 0.0
      %2503 = vmatpush.msra.mxu0 0.0
      %2504 = vmatpush.msra.mxu0 0.0
      %2505 = vmatpush.msra.mxu0 0.0
      %2506 = vmatpush.msra.mxu0 0.0
      %2507 = vmatpush.msra.mxu0 0.0
      %2508 = vmatpush.msra.mxu0 0.0
      %2509 = vmatpush.msra.mxu0 %v2492
      %2510 = vmatmul.f32.gmra.mxu0 %v2396
      %v2511 = vpop.f32.mrf.mxu0
      %v2512 = vadd.f32 0.0, %v2511
      %2513 = vmatmul.f32.gmra.mxu0 %v2399
      %v2514 = vpop.f32.mrf.mxu0
      %v2515 = vadd.f32 0.0, %v2514
      %2516 = vmatmul.f32.gmra.mxu0 %v2402
      %v2517 = vpop.f32.mrf.mxu0
      %v2518 = vadd.f32 0.0, %v2517
      %2519 = vmatmul.f32.gmra.mxu0 %v2405
      %v2520 = vpop.f32.mrf.mxu0
      %v2521 = vadd.f32 0.0, %v2520
      %2522 = vmatmul.f32.gmra.mxu0 %v2408
      %v2523 = vpop.f32.mrf.mxu0
      %v2524 = vadd.f32 0.0, %v2523
      %2525 = vmatmul.f32.gmra.mxu0 %v2411
      %v2526 = vpop.f32.mrf.mxu0
      %v2527 = vadd.f32 0.0, %v2526
      %2528 = vmatmul.f32.gmra.mxu0 %v2414
      %v2529 = vpop.f32.mrf.mxu0
      %v2530 = vadd.f32 0.0, %v2529
      %2531 = vmatmul.f32.gmra.mxu0 %v2417
      %v2532 = vpop.f32.mrf.mxu0
      %v2533 = vadd.f32 0.0, %v2532
      %2534 = vmatmul.f32.gmra.mxu0 %v2420
      %v2535 = vpop.f32.mrf.mxu0
      %v2536 = vadd.f32 0.0, %v2535
      %2537 = vmatmul.f32.gmra.mxu0 %v2423
      %v2538 = vpop.f32.mrf.mxu0
      %v2539 = vadd.f32 0.0, %v2538
      %2540 = vmatmul.f32.gmra.mxu0 %v2426
      %v2541 = vpop.f32.mrf.mxu0
      %v2542 = vadd.f32 0.0, %v2541
      %2543 = vmatmul.f32.gmra.mxu0 %v2429
      %v2544 = vpop.f32.mrf.mxu0
      %v2545 = vadd.f32 0.0, %v2544
      %2546 = vmatmul.f32.gmra.mxu0 %v2432
      %v2547 = vpop.f32.mrf.mxu0
      %v2548 = vadd.f32 0.0, %v2547
      %2549 = vmatmul.f32.gmra.mxu0 %v2435
      %v2550 = vpop.f32.mrf.mxu0
      %v2551 = vadd.f32 0.0, %v2550
      %2552 = vmatmul.f32.gmra.mxu0 %v2438
      %v2553 = vpop.f32.mrf.mxu0
      %v2554 = vadd.f32 0.0, %v2553
      %2555 = vmatmul.f32.gmra.mxu0 %v2441
      %v2556 = vpop.f32.mrf.mxu0
      %v2557 = vadd.f32 0.0, %v2556
      %2558 = vmatmul.f32.gmra.mxu0 %v2444
      %v2559 = vpop.f32.mrf.mxu0
      %v2560 = vadd.f32 0.0, %v2559
      %2561 = vmatmul.f32.gmra.mxu0 %v2447
      %v2562 = vpop.f32.mrf.mxu0
      %v2563 = vadd.f32 0.0, %v2562
      %2564 = vmatmul.f32.gmra.mxu0 %v2450
      %v2565 = vpop.f32.mrf.mxu0
      %v2566 = vadd.f32 0.0, %v2565
      %2567 = vmatmul.f32.gmra.mxu0 %v2453
      %v2568 = vpop.f32.mrf.mxu0
      %v2569 = vadd.f32 0.0, %v2568
      %2570 = vmatmul.f32.gmra.mxu0 %v2456
      %v2571 = vpop.f32.mrf.mxu0
      %v2572 = vadd.f32 0.0, %v2571
      %2573 = vmatmul.f32.gmra.mxu0 %v2459
      %v2574 = vpop.f32.mrf.mxu0
      %v2575 = vadd.f32 0.0, %v2574
      %2576 = vmatmul.f32.gmra.mxu0 %v2462
      %v2577 = vpop.f32.mrf.mxu0
      %v2578 = vadd.f32 0.0, %v2577
      %2579 = vmatmul.f32.gmra.mxu0 %v2465
      %v2580 = vpop.f32.mrf.mxu0
      %v2581 = vadd.f32 0.0, %v2580
      %2582 = vmatmul.f32.gmra.mxu0 %v2468
      %v2583 = vpop.f32.mrf.mxu0
      %v2584 = vadd.f32 0.0, %v2583
      %2585 = vmatmul.f32.gmra.mxu0 %v2471
      %v2586 = vpop.f32.mrf.mxu0
      %v2587 = vadd.f32 0.0, %v2586
      %2588 = vmatmul.f32.gmra.mxu0 %v2474
      %v2589 = vpop.f32.mrf.mxu0
      %v2590 = vadd.f32 0.0, %v2589
      %2591 = vmatmul.f32.gmra.mxu0 %v2477
      %v2592 = vpop.f32.mrf.mxu0
      %v2593 = vadd.f32 0.0, %v2592
      %2594 = vmatmul.f32.gmra.mxu0 %v2480
      %v2595 = vpop.f32.mrf.mxu0
      %v2596 = vadd.f32 0.0, %v2595
      %2597 = vmatmul.f32.gmra.mxu0 %v2483
      %v2598 = vpop.f32.mrf.mxu0
      %v2599 = vadd.f32 0.0, %v2598
      %2600 = vmatmul.f32.gmra.mxu0 %v2486
      %v2601 = vpop.f32.mrf.mxu0
      %v2602 = vadd.f32 0.0, %v2601
      %2603 = vmatmul.f32.gmra.mxu0 %v2489
      %v2604 = vpop.f32.mrf.mxu0
      %v2605 = vadd.f32 0.0, %v2604
      %2606 = vdwg.mxu0
      %v2607 = vadd.f32 %v2329, %v2512
      %v2608 = vadd.f32 %v2330, %v2515
      %v2609 = vadd.f32 %v2331, %v2518
      %v2610 = vadd.f32 %v2332, %v2521
      %v2611 = vadd.f32 %v2333, %v2524
      %v2612 = vadd.f32 %v2334, %v2527
      %v2613 = vadd.f32 %v2335, %v2530
      %v2614 = vadd.f32 %v2336, %v2533
      %v2615 = vadd.f32 %v2337, %v2536
      %v2616 = vadd.f32 %v2338, %v2539
      %v2617 = vadd.f32 %v2339, %v2542
      %v2618 = vadd.f32 %v2340, %v2545
      %v2619 = vadd.f32 %v2341, %v2548
      %v2620 = vadd.f32 %v2342, %v2551
      %v2621 = vadd.f32 %v2343, %v2554
      %v2622 = vadd.f32 %v2344, %v2557
      %v2623 = vadd.f32 %v2345, %v2560
      %v2624 = vadd.f32 %v2346, %v2563
      %v2625 = vadd.f32 %v2347, %v2566
      %v2626 = vadd.f32 %v2348, %v2569
      %v2627 = vadd.f32 %v2349, %v2572
      %v2628 = vadd.f32 %v2350, %v2575
      %v2629 = vadd.f32 %v2351, %v2578
      %v2630 = vadd.f32 %v2352, %v2581
      %v2631 = vadd.f32 %v2353, %v2584
      %v2632 = vadd.f32 %v2354, %v2587
      %v2633 = vadd.f32 %v2355, %v2590
      %v2634 = vadd.f32 %v2356, %v2593
      %v2635 = vadd.f32 %v2357, %v2596
      %v2636 = vadd.f32 %v2358, %v2599
      %v2637 = vadd.f32 %v2359, %v2602
      %v2638 = vadd.f32 %v2360, %v2605
      %v2639 = vld [vmem:[%s2] sm:$0x1]
      %v2641 = vperm.slane %v2639, 0
      %v2643 = vmul.f32 %v2607, %v2641
      %v2644 = vmul.f32 %v2608, %v2641
      %v2645 = vmul.f32 %v2609, %v2641
      %v2646 = vmul.f32 %v2610, %v2641
      %v2647 = vmul.f32 %v2611, %v2641
      %v2648 = vmul.f32 %v2612, %v2641
      %v2649 = vmul.f32 %v2613, %v2641
      %v2650 = vmul.f32 %v2614, %v2641
      %v2651 = vmul.f32 %v2615, %v2641
      %v2652 = vmul.f32 %v2616, %v2641
      %v2653 = vmul.f32 %v2617, %v2641
      %v2654 = vmul.f32 %v2618, %v2641
      %v2655 = vmul.f32 %v2619, %v2641
      %v2656 = vmul.f32 %v2620, %v2641
      %v2657 = vmul.f32 %v2621, %v2641
      %v2658 = vmul.f32 %v2622, %v2641
      %v2659 = vmul.f32 %v2623, %v2641
      %v2660 = vmul.f32 %v2624, %v2641
      %v2661 = vmul.f32 %v2625, %v2641
      %v2662 = vmul.f32 %v2626, %v2641
      %v2663 = vmul.f32 %v2627, %v2641
      %v2664 = vmul.f32 %v2628, %v2641
      %v2665 = vmul.f32 %v2629, %v2641
      %v2666 = vmul.f32 %v2630, %v2641
      %v2667 = vmul.f32 %v2631, %v2641
      %v2668 = vmul.f32 %v2632, %v2641
      %v2669 = vmul.f32 %v2633, %v2641
      %v2670 = vmul.f32 %v2634, %v2641
      %v2671 = vmul.f32 %v2635, %v2641
      %v2672 = vmul.f32 %v2636, %v2641
      %v2673 = vmul.f32 %v2637, %v2641
      %v2674 = vmul.f32 %v2638, %v2641
      %v2675 = vld [vmem:[%s3] sm:$0x1]
      %v2677 = vperm.slane %v2675, 0
      %v2679 = vadd.f32 %v2643, %v2677
      %v2680 = vadd.f32 %v2644, %v2677
      %v2681 = vadd.f32 %v2645, %v2677
      %v2682 = vadd.f32 %v2646, %v2677
      %v2683 = vadd.f32 %v2647, %v2677
      %v2684 = vadd.f32 %v2648, %v2677
      %v2685 = vadd.f32 %v2649, %v2677
      %v2686 = vadd.f32 %v2650, %v2677
      %v2687 = vadd.f32 %v2651, %v2677
      %v2688 = vadd.f32 %v2652, %v2677
      %v2689 = vadd.f32 %v2653, %v2677
      %v2690 = vadd.f32 %v2654, %v2677
      %v2691 = vadd.f32 %v2655, %v2677
      %v2692 = vadd.f32 %v2656, %v2677
      %v2693 = vadd.f32 %v2657, %v2677
      %v2694 = vadd.f32 %v2658, %v2677
      %v2695 = vadd.f32 %v2659, %v2677
      %v2696 = vadd.f32 %v2660, %v2677
      %v2697 = vadd.f32 %v2661, %v2677
      %v2698 = vadd.f32 %v2662, %v2677
      %v2699 = vadd.f32 %v2663, %v2677
      %v2700 = vadd.f32 %v2664, %v2677
      %v2701 = vadd.f32 %v2665, %v2677
      %v2702 = vadd.f32 %v2666, %v2677
      %v2703 = vadd.f32 %v2667, %v2677
      %v2704 = vadd.f32 %v2668, %v2677
      %v2705 = vadd.f32 %v2669, %v2677
      %v2706 = vadd.f32 %v2670, %v2677
      %v2707 = vadd.f32 %v2671, %v2677
      %v2708 = vadd.f32 %v2672, %v2677
      %v2709 = vadd.f32 %v2673, %v2677
      %v2710 = vadd.f32 %v2674, %v2677
      %v2711 = vmax.f32 %v2679, 0.0
      %v2712 = vmax.f32 %v2680, 0.0
      %v2713 = vmax.f32 %v2681, 0.0
      %v2714 = vmax.f32 %v2682, 0.0
      %v2715 = vmax.f32 %v2683, 0.0
      %v2716 = vmax.f32 %v2684, 0.0
      %v2717 = vmax.f32 %v2685, 0.0
      %v2718 = vmax.f32 %v2686, 0.0
      %v2719 = vmax.f32 %v2687, 0.0
      %v2720 = vmax.f32 %v2688, 0.0
      %v2721 = vmax.f32 %v2689, 0.0
      %v2722 = vmax.f32 %v2690, 0.0
      %v2723 = vmax.f32 %v2691, 0.0
      %v2724 = vmax.f32 %v2692, 0.0
      %v2725 = vmax.f32 %v2693, 0.0
      %v2726 = vmax.f32 %v2694, 0.0
      %v2727 = vmax.f32 %v2695, 0.0
      %v2728 = vmax.f32 %v2696, 0.0
      %v2729 = vmax.f32 %v2697, 0.0
      %v2730 = vmax.f32 %v2698, 0.0
      %v2731 = vmax.f32 %v2699, 0.0
      %v2732 = vmax.f32 %v2700, 0.0
      %v2733 = vmax.f32 %v2701, 0.0
      %v2734 = vmax.f32 %v2702, 0.0
      %v2735 = vmax.f32 %v2703, 0.0
      %v2736 = vmax.f32 %v2704, 0.0
      %v2737 = vmax.f32 %v2705, 0.0
      %v2738 = vmax.f32 %v2706, 0.0
      %v2739 = vmax.f32 %v2707, 0.0
      %v2740 = vmax.f32 %v2708, 0.0
      %v2741 = vmax.f32 %v2709, 0.0
      %v2742 = vmax.f32 %v2710, 0.0
      %2743 = vst.msk [vmem:[%s197] sm:$0xff] %vm266, %v2711
      %2744 = vst.msk [vmem:[%s197 + $0x8] sm:$0xff] %vm266, %v2712
      %2745 = vst.msk [vmem:[%s197 + $0x10] sm:$0xff] %vm266, %v2713
      %2746 = vst.msk [vmem:[%s197 + $0x18] sm:$0xff] %vm266, %v2714
      %2747 = vst.msk [vmem:[%s197 + $0x20] sm:$0xff] %vm266, %v2715
      %2748 = vst.msk [vmem:[%s197 + $0x28] sm:$0xff] %vm266, %v2716
      %2749 = vst.msk [vmem:[%s197 + $0x30] sm:$0xff] %vm266, %v2717
      %2750 = vst.msk [vmem:[%s197 + $0x38] sm:$0xff] %vm266, %v2718
      %2751 = vst.msk [vmem:[%s197 + $0x40] sm:$0xff] %vm266, %v2719
      %2752 = vst.msk [vmem:[%s197 + $0x48] sm:$0xff] %vm266, %v2720
      %2753 = vst.msk [vmem:[%s197 + $0x50] sm:$0xff] %vm266, %v2721
      %2754 = vst.msk [vmem:[%s197 + $0x58] sm:$0xff] %vm266, %v2722
      %2755 = vst.msk [vmem:[%s197 + $0x60] sm:$0xff] %vm266, %v2723
      %2756 = vst.msk [vmem:[%s197 + $0x68] sm:$0xff] %vm266, %v2724
      %2757 = vst.msk [vmem:[%s197 + $0x70] sm:$0xff] %vm266, %v2725
      %2758 = vst.msk [vmem:[%s197 + $0x78] sm:$0xff] %vm266, %v2726
      %2759 = vst.msk [vmem:[%s197 + $0x80] sm:$0xff] %vm266, %v2727
      %2760 = vst.msk [vmem:[%s197 + $0x88] sm:$0xff] %vm266, %v2728
      %2761 = vst.msk [vmem:[%s197 + $0x90] sm:$0xff] %vm266, %v2729
      %2762 = vst.msk [vmem:[%s197 + $0x98] sm:$0xff] %vm266, %v2730
      %2763 = vst.msk [vmem:[%s197 + $0xa0] sm:$0xff] %vm266, %v2731
      %2764 = vst.msk [vmem:[%s197 + $0xa8] sm:$0xff] %vm266, %v2732
      %2765 = vst.msk [vmem:[%s197 + $0xb0] sm:$0xff] %vm266, %v2733
      %2766 = vst.msk [vmem:[%s197 + $0xb8] sm:$0xff] %vm266, %v2734
      %2767 = vst.msk [vmem:[%s197 + $0xc0] sm:$0xff] %vm266, %v2735
      %2768 = vst.msk [vmem:[%s197 + $0xc8] sm:$0xff] %vm266, %v2736
      %2769 = vst.msk [vmem:[%s197 + $0xd0] sm:$0xff] %vm266, %v2737
      %2770 = vst.msk [vmem:[%s197 + $0xd8] sm:$0xff] %vm266, %v2738
      %2771 = vst.msk [vmem:[%s197 + $0xe0] sm:$0xff] %vm266, %v2739
      %2772 = vst.msk [vmem:[%s197 + $0xe8] sm:$0xff] %vm266, %v2740
      %2773 = vst.msk [vmem:[%s197 + $0xf0] sm:$0xff] %vm266, %v2741
      %2774 = vst.msk [vmem:[%s197 + $0xf8] sm:$0xff] %vm266, %v2742
      %p2775 = scmp.lt.s32.totalorder %s15, 1
      %s2776 = scalar_select %p2775, %s15, 1
      %s2777 = smul.addr %s2776, 32
      %s2778 = smul.addr %s2777, 8
      %s2779 = scalar_lea.vmem %s4, %s2778
      // Predicated region
      $region37: #{tpu_custom_call.1} parent=35 // pred_check
        %p2780 = pneg %p122
      $region38: #{tpu_custom_call.1} parent=35 // pred_check_branch
        %2782 = sbr.rel (%p2780) target = $region40
      $region39: #{tpu_custom_call.1} parent=35 // pred_region
        _
      $region40: #{tpu_custom_call.1} parent=35 // pred_fallthru
        _
    $region36: #{tpu_custom_call.1} parent=5 // pred_fallthru
      _
    %p2783 = scmp.le.s32.totalorder 2, %s10
    // Predicated region
    $region41: #{tpu_custom_call.1} parent=5 // pred_check
      %p2784 = pneg %p2783
    $region42: #{tpu_custom_call.1} parent=5 // pred_check_branch
      %2786 = sbr.rel (%p2784) target = $region44
    $region43: #{tpu_custom_call.1} parent=5 // pred_region
      %s2787 = ssub.s32 %s10, 2
      // Predicated region
      $region45: #{tpu_custom_call.1} parent=43 // pred_check
        %p2788 = pneg %p128
      $region46: #{tpu_custom_call.1} parent=43 // pred_check_branch
        %2790 = sbr.rel (%p2788) target = $region48
      $region47: #{tpu_custom_call.1} parent=43 // pred_region
        %p2791 = scmp.lt.s32.totalorder %s16, 1
        %s2792 = scalar_select %p2791, %s16, 1
        %s2793 = smul.addr %s2792, 32
        %s2794 = smul.addr %s2793, 8
        %s2795 = scalar_lea.vmem %s4, %s2794
      $region48: #{tpu_custom_call.1} parent=43 // pred_fallthru
        _
    $region44: #{tpu_custom_call.1} parent=5 // pred_fallthru
      _
  $region6: #{tpu_custom_call.1} parent=0 // loop_footer
    %s14 = sadd.s32 1, %s10
  $region7: #{tpu_custom_call.1} parent=0 // loop_footer_branch
    %9 = sbr.rel target = $region3
  $region8: #{tpu_custom_call.1} parent=0 // loop_exit
    _

</llo_original>
